<compile_context>
chip_gen: v7x
topology: tpu7x:2x2x1
jax: 0.10.0
libtpu: 0.0.40
codegen_flags: <defaults>
</compile_context>

<pallas_src>
import functools

import jax
import jax.numpy as jnp
from jax.experimental import pallas as pl
from jax.experimental.pallas import tpu as pltpu


def rnn_fc_kernel(
    x_ref,      # (T*B, I)  float32, time-major flattened: row t*B + b = x[b, t, :]
    len_ref,    # (B, 1)    int32
    wih0_ref,   # (I, H)
    whh0_ref,   # (H, H)
    b0_ref,     # (1, H)    = b_ih_l0 + b_hh_l0
    w1s_ref,    # (2H, H)   = [W_ih_l1^T ; W_hh_l1^T] stacked
    b1_ref,     # (1, H)    = b_ih_l1 + b_hh_l1
    wfc_ref,    # (H, O)
    bfc_ref,    # (1, O)
    out_ref,    # (B, O)
    *,
    T: int,
    B: int,
):
    H = whh0_ref.shape[0]

    # ---------- hoisted, non-recurrent work (off the serial critical path) ----------
    # Layer-0 input projection for ALL timesteps in one MXU matmul, bias folded in.
    xproj = (
        jnp.dot(x_ref[...], wih0_ref[...], preferred_element_type=jnp.float32)
        + b0_ref[...]
    )                                                      # (T*B, H)

    # Packed-sequence masks, pre-broadcast to (T, B, H) once: True while t < lengths[b].
    t_idx = jax.lax.broadcasted_iota(jnp.int32, (T, B, H), 0)
    masks = len_ref[...][None, :, :] > t_idx               # (T, B, H) bool

    # Hoist weight loads and the (1,H)->(B,H) bias broadcast out of the loop.
    whh0 = whh0_ref[...]
    w1s = w1s_ref[...]
    b1 = jnp.broadcast_to(b1_ref[...], (B, H))

    # ---------- recurrent chain, fully unrolled (T is small and static) ----------
    h0 = jnp.zeros((B, H), jnp.float32)
    h1 = jnp.zeros((B, H), jnp.float32)
    for t in range(T):
        m = masks[t]                                       # (B, H) bool, static slice
        x0_t = xproj[t * B:(t + 1) * B, :]                 # (B, H), static sublane slice

        # layer 0: h0_t = tanh(xproj_t + h0_{t-1} @ W_hh0^T)   (biases already folded)
        h0_new = jnp.tanh(
            x0_t + jnp.dot(h0, whh0, preferred_element_type=jnp.float32)
        )
        h0 = jnp.where(m, h0_new, h0)                      # freeze rows past lengths[b]

        # layer 1: both matmuls fused into a single MXU push via the stacked weight.
        z1 = jnp.concatenate([h0, h1], axis=-1)            # (B, 2H)
        h1_new = jnp.tanh(
            jnp.dot(z1, w1s, preferred_element_type=jnp.float32) + b1
        )
        h1 = jnp.where(m, h1_new, h1)

    # fc head on the last layer's final hidden state
    out_ref[...] = (
        jnp.dot(h1, wfc_ref[...], preferred_element_type=jnp.float32)
        + bfc_ref[...]
    )


def rnn_model_forward(x, lengths, params):
    """x: (B, T, I) float32 batch-first; lengths: (B,) int32. Returns (B, O)."""
    B, T, I = x.shape
    H = params["w_ih_l0"].shape[0]
    O = params["w_fc"].shape[0]

    # Time-major, flattened to (T*B, I) so the hoisted projection is one 2-D matmul.
    x_tm = jnp.transpose(x, (1, 0, 2)).reshape(T * B, I).astype(jnp.float32)
    len2d = lengths.astype(jnp.int32).reshape(B, 1)

    # Pre-transpose weights so the kernel does x @ W; fold the two biases per layer;
    # stack layer-1's input/recurrent weights for the fused per-step matmul.
    wih0 = params["w_ih_l0"].T                                        # (I, H)
    whh0 = params["w_hh_l0"].T                                        # (H, H)
    b0 = (params["b_ih_l0"] + params["b_hh_l0"]).reshape(1, H)
    w1s = jnp.concatenate(
        [params["w_ih_l1"].T, params["w_hh_l1"].T], axis=0)           # (2H, H)
    b1 = (params["b_ih_l1"] + params["b_hh_l1"]).reshape(1, H)
    wfc = params["w_fc"].T                                            # (H, O)
    bfc = params["b_fc"].reshape(1, O)

    vmem = pl.BlockSpec(memory_space=pltpu.MemorySpace.VMEM)
    kernel = functools.partial(rnn_fc_kernel, T=T, B=B)
    return pl.pallas_call(
        kernel,
        out_shape=jax.ShapeDtypeStruct((B, O), jnp.float32),
        in_specs=[vmem] * 9,
        out_specs=vmem,
    )(x_tm, len2d, wih0, whh0, b0, w1s, b1, wfc, bfc)


def reference_forward(x, lengths, params):
    """Pure-JAX reference mirroring torch pack_padded_sequence + RNN + Linear."""
    B, T, I = x.shape
    H = params["w_ih_l0"].shape[0]
    h0 = jnp.zeros((B, H), jnp.float32)
    h1 = jnp.zeros((B, H), jnp.float32)
    for t in range(T):
        mask = (lengths > t)[:, None]
        x_t = x[:, t, :]
        h0_new = jnp.tanh(x_t @ params["w_ih_l0"].T + params["b_ih_l0"]
                          + h0 @ params["w_hh_l0"].T + params["b_hh_l0"])
        h0 = jnp.where(mask, h0_new, h0)
        h1_new = jnp.tanh(h0 @ params["w_ih_l1"].T + params["b_ih_l1"]
                          + h1 @ params["w_hh_l1"].T + params["b_hh_l1"])
        h1 = jnp.where(mask, h1_new, h1)
    return h1 @ params["w_fc"].T + params["b_fc"]


def init_params(key, input_size, hidden_size, output_size):
    """Deterministic init matching torch's shapes (uniform(-1/sqrt(H), 1/sqrt(H)))."""
    ks = jax.random.split(key, 10)
    s = 1.0 / jnp.sqrt(hidden_size)
    u = lambda k, shape: jax.random.uniform(k, shape, jnp.float32, -s, s)
    return {
        "w_ih_l0": u(ks[0], (hidden_size, input_size)),
        "w_hh_l0": u(ks[1], (hidden_size, hidden_size)),
        "b_ih_l0": u(ks[2], (hidden_size,)),
        "b_hh_l0": u(ks[3], (hidden_size,)),
        "w_ih_l1": u(ks[4], (hidden_size, hidden_size)),
        "w_hh_l1": u(ks[5], (hidden_size, hidden_size)),
        "b_ih_l1": u(ks[6], (hidden_size,)),
        "b_hh_l1": u(ks[7], (hidden_size,)),
        "w_fc":    u(ks[8], (output_size, hidden_size)),
        "b_fc":    u(ks[9], (output_size,)),
    }


if __name__ == "__main__":
    # ModelArgs: input_size=16, hidden_size=32, num_layers=2, nonlinearity='tanh',
    #            dropout=0.0, output_size=8
    B, T, I, H, O = 8, 8, 16, 32, 8

    key = jax.random.PRNGKey(0)
    k_x, k_p = jax.random.split(key)
    x = jax.random.normal(k_x, (B, T, I), jnp.float32)            # batch-first like torch
    lengths = jnp.array([8, 5, 3, 8, 1, 6, 7, 4], jnp.int32)      # variable sequence lengths
    params = init_params(k_p, I, H, O)

    out = rnn_model_forward(x, lengths, params)
    out = jax.block_until_ready(out)

    ref = reference_forward(x, lengths, params)
    assert out.shape == (B, O)
    assert jnp.allclose(out, ref, atol=1e-5, rtol=1e-5), "mismatch vs pure-JAX reference"

    print("KERNEL_OK")
</pallas_src>

<mosaic_0001>
module attributes {stable_mosaic.version = 11 : i64} {
  func.func @rnn_fc_kernel(%arg0: memref<64x16xf32, #tpu.memory_space<vmem>>, %arg1: memref<8x1xi32, #tpu.memory_space<vmem>>, %arg2: memref<16x32xf32, #tpu.memory_space<vmem>>, %arg3: memref<32x32xf32, #tpu.memory_space<vmem>>, %arg4: memref<1x32xf32, #tpu.memory_space<vmem>>, %arg5: memref<64x32xf32, #tpu.memory_space<vmem>>, %arg6: memref<1x32xf32, #tpu.memory_space<vmem>>, %arg7: memref<32x8xf32, #tpu.memory_space<vmem>>, %arg8: memref<1x8xf32, #tpu.memory_space<vmem>>, %arg9: memref<8x8xf32, #tpu.memory_space<vmem>>) attributes {dimension_semantics = [], scalar_prefetch = 0 : i64, scratch_operands = 0 : i64, tpu.core_type = #tpu.core_type<tc>} {
    %c0 = arith.constant 0 : index
    %c0_0 = arith.constant 0 : index
    %0 = vector.load %arg0[%c0, %c0_0] : memref<64x16xf32, #tpu.memory_space<vmem>>, vector<64x16xf32>
    %c0_1 = arith.constant 0 : index
    %c0_2 = arith.constant 0 : index
    %1 = vector.load %arg2[%c0_1, %c0_2] : memref<16x32xf32, #tpu.memory_space<vmem>>, vector<16x32xf32>
    %cst = arith.constant dense<0.000000e+00> : vector<64x32xf32>
    %2 = tpu.matmul %0, %1, %cst {dimension_numbers = #tpu.dot_dimension_numbers<[1], [0], [0], [1], [0, 0, 1, 1], [], []>} : vector<64x16xf32>, vector<16x32xf32>, vector<64x32xf32> -> vector<64x32xf32>
    %c0_3 = arith.constant 0 : index
    %c0_4 = arith.constant 0 : index
    %3 = vector.load %arg4[%c0_3, %c0_4] : memref<1x32xf32, #tpu.memory_space<vmem>>, vector<1x32xf32>
    %4 = vector.broadcast %3 : vector<1x32xf32> to vector<64x32xf32>
    %5 = arith.addf %2, %4 : vector<64x32xf32>
    %6 = tpu.iota {dimensions = array<i32: 0>} : vector<8x8x32xi32>
    %c0_5 = arith.constant 0 : index
    %c0_6 = arith.constant 0 : index
    %7 = vector.load %arg1[%c0_5, %c0_6] : memref<8x1xi32, #tpu.memory_space<vmem>>, vector<8x1xi32>
    %8 = vector.shape_cast %7 : vector<8x1xi32> to vector<1x8x1xi32>
    %9 = vector.broadcast %8 : vector<1x8x1xi32> to vector<8x8x32xi32>
    %10 = arith.cmpi sgt, %9, %6 : vector<8x8x32xi32>
    %c0_7 = arith.constant 0 : index
    %c0_8 = arith.constant 0 : index
    %11 = vector.load %arg3[%c0_7, %c0_8] : memref<32x32xf32, #tpu.memory_space<vmem>>, vector<32x32xf32>
    %c0_9 = arith.constant 0 : index
    %c0_10 = arith.constant 0 : index
    %12 = vector.load %arg5[%c0_9, %c0_10] : memref<64x32xf32, #tpu.memory_space<vmem>>, vector<64x32xf32>
    %c0_11 = arith.constant 0 : index
    %c0_12 = arith.constant 0 : index
    %13 = vector.load %arg6[%c0_11, %c0_12] : memref<1x32xf32, #tpu.memory_space<vmem>>, vector<1x32xf32>
    %14 = vector.shape_cast %13 : vector<1x32xf32> to vector<1x32xf32>
    %15 = vector.broadcast %14 : vector<1x32xf32> to vector<8x32xf32>
    %cst_13 = arith.constant 0.000000e+00 : f32
    %16 = vector.broadcast %cst_13 : f32 to vector<8x32xf32>
    %cst_14 = arith.constant 0.000000e+00 : f32
    %17 = vector.broadcast %cst_14 : f32 to vector<8x32xf32>
    %18 = vector.extract_strided_slice %10 {offsets = [0, 0, 0], sizes = [1, 8, 32], strides = [1, 1, 1]} : vector<8x8x32xi1> to vector<1x8x32xi1>
    %19 = vector.shape_cast %18 : vector<1x8x32xi1> to vector<8x32xi1>
    %20 = vector.extract_strided_slice %5 {offsets = [0, 0], sizes = [8, 32], strides = [1, 1]} : vector<64x32xf32> to vector<8x32xf32>
    %cst_15 = arith.constant dense<0.000000e+00> : vector<8x32xf32>
    %21 = tpu.matmul %16, %11, %cst_15 {dimension_numbers = #tpu.dot_dimension_numbers<[1], [0], [0], [1], [0, 0, 1, 1], [], []>} : vector<8x32xf32>, vector<32x32xf32>, vector<8x32xf32> -> vector<8x32xf32>
    %22 = arith.addf %20, %21 : vector<8x32xf32>
    %23 = math.tanh %22 : vector<8x32xf32>
    %24 = arith.select %19, %23, %16 : vector<8x32xi1>, vector<8x32xf32>
    %25 = tpu.concatenate %24, %17 in 1 : vector<8x32xf32>, vector<8x32xf32> -> vector<8x64xf32>
    %cst_16 = arith.constant dense<0.000000e+00> : vector<8x32xf32>
    %26 = tpu.matmul %25, %12, %cst_16 {dimension_numbers = #tpu.dot_dimension_numbers<[1], [0], [0], [1], [0, 0, 1, 1], [], []>} : vector<8x64xf32>, vector<64x32xf32>, vector<8x32xf32> -> vector<8x32xf32>
    %27 = arith.addf %26, %15 : vector<8x32xf32>
    %28 = math.tanh %27 : vector<8x32xf32>
    %29 = arith.select %19, %28, %17 : vector<8x32xi1>, vector<8x32xf32>
    %30 = vector.extract_strided_slice %10 {offsets = [1, 0, 0], sizes = [1, 8, 32], strides = [1, 1, 1]} : vector<8x8x32xi1> to vector<1x8x32xi1>
    %31 = vector.shape_cast %30 : vector<1x8x32xi1> to vector<8x32xi1>
    %32 = vector.extract_strided_slice %5 {offsets = [8, 0], sizes = [8, 32], strides = [1, 1]} : vector<64x32xf32> to vector<8x32xf32>
    %cst_17 = arith.constant dense<0.000000e+00> : vector<8x32xf32>
    %33 = tpu.matmul %24, %11, %cst_17 {dimension_numbers = #tpu.dot_dimension_numbers<[1], [0], [0], [1], [0, 0, 1, 1], [], []>} : vector<8x32xf32>, vector<32x32xf32>, vector<8x32xf32> -> vector<8x32xf32>
    %34 = arith.addf %32, %33 : vector<8x32xf32>
    %35 = math.tanh %34 : vector<8x32xf32>
    %36 = arith.select %31, %35, %24 : vector<8x32xi1>, vector<8x32xf32>
    %37 = tpu.concatenate %36, %29 in 1 : vector<8x32xf32>, vector<8x32xf32> -> vector<8x64xf32>
    %cst_18 = arith.constant dense<0.000000e+00> : vector<8x32xf32>
    %38 = tpu.matmul %37, %12, %cst_18 {dimension_numbers = #tpu.dot_dimension_numbers<[1], [0], [0], [1], [0, 0, 1, 1], [], []>} : vector<8x64xf32>, vector<64x32xf32>, vector<8x32xf32> -> vector<8x32xf32>
    %39 = arith.addf %38, %15 : vector<8x32xf32>
    %40 = math.tanh %39 : vector<8x32xf32>
    %41 = arith.select %31, %40, %29 : vector<8x32xi1>, vector<8x32xf32>
    %42 = vector.extract_strided_slice %10 {offsets = [2, 0, 0], sizes = [1, 8, 32], strides = [1, 1, 1]} : vector<8x8x32xi1> to vector<1x8x32xi1>
    %43 = vector.shape_cast %42 : vector<1x8x32xi1> to vector<8x32xi1>
    %44 = vector.extract_strided_slice %5 {offsets = [16, 0], sizes = [8, 32], strides = [1, 1]} : vector<64x32xf32> to vector<8x32xf32>
    %cst_19 = arith.constant dense<0.000000e+00> : vector<8x32xf32>
    %45 = tpu.matmul %36, %11, %cst_19 {dimension_numbers = #tpu.dot_dimension_numbers<[1], [0], [0], [1], [0, 0, 1, 1], [], []>} : vector<8x32xf32>, vector<32x32xf32>, vector<8x32xf32> -> vector<8x32xf32>
    %46 = arith.addf %44, %45 : vector<8x32xf32>
    %47 = math.tanh %46 : vector<8x32xf32>
    %48 = arith.select %43, %47, %36 : vector<8x32xi1>, vector<8x32xf32>
    %49 = tpu.concatenate %48, %41 in 1 : vector<8x32xf32>, vector<8x32xf32> -> vector<8x64xf32>
    %cst_20 = arith.constant dense<0.000000e+00> : vector<8x32xf32>
    %50 = tpu.matmul %49, %12, %cst_20 {dimension_numbers = #tpu.dot_dimension_numbers<[1], [0], [0], [1], [0, 0, 1, 1], [], []>} : vector<8x64xf32>, vector<64x32xf32>, vector<8x32xf32> -> vector<8x32xf32>
    %51 = arith.addf %50, %15 : vector<8x32xf32>
    %52 = math.tanh %51 : vector<8x32xf32>
    %53 = arith.select %43, %52, %41 : vector<8x32xi1>, vector<8x32xf32>
    %54 = vector.extract_strided_slice %10 {offsets = [3, 0, 0], sizes = [1, 8, 32], strides = [1, 1, 1]} : vector<8x8x32xi1> to vector<1x8x32xi1>
    %55 = vector.shape_cast %54 : vector<1x8x32xi1> to vector<8x32xi1>
    %56 = vector.extract_strided_slice %5 {offsets = [24, 0], sizes = [8, 32], strides = [1, 1]} : vector<64x32xf32> to vector<8x32xf32>
    %cst_21 = arith.constant dense<0.000000e+00> : vector<8x32xf32>
    %57 = tpu.matmul %48, %11, %cst_21 {dimension_numbers = #tpu.dot_dimension_numbers<[1], [0], [0], [1], [0, 0, 1, 1], [], []>} : vector<8x32xf32>, vector<32x32xf32>, vector<8x32xf32> -> vector<8x32xf32>
    %58 = arith.addf %56, %57 : vector<8x32xf32>
    %59 = math.tanh %58 : vector<8x32xf32>
    %60 = arith.select %55, %59, %48 : vector<8x32xi1>, vector<8x32xf32>
    %61 = tpu.concatenate %60, %53 in 1 : vector<8x32xf32>, vector<8x32xf32> -> vector<8x64xf32>
    %cst_22 = arith.constant dense<0.000000e+00> : vector<8x32xf32>
    %62 = tpu.matmul %61, %12, %cst_22 {dimension_numbers = #tpu.dot_dimension_numbers<[1], [0], [0], [1], [0, 0, 1, 1], [], []>} : vector<8x64xf32>, vector<64x32xf32>, vector<8x32xf32> -> vector<8x32xf32>
    %63 = arith.addf %62, %15 : vector<8x32xf32>
    %64 = math.tanh %63 : vector<8x32xf32>
    %65 = arith.select %55, %64, %53 : vector<8x32xi1>, vector<8x32xf32>
    %66 = vector.extract_strided_slice %10 {offsets = [4, 0, 0], sizes = [1, 8, 32], strides = [1, 1, 1]} : vector<8x8x32xi1> to vector<1x8x32xi1>
    %67 = vector.shape_cast %66 : vector<1x8x32xi1> to vector<8x32xi1>
    %68 = vector.extract_strided_slice %5 {offsets = [32, 0], sizes = [8, 32], strides = [1, 1]} : vector<64x32xf32> to vector<8x32xf32>
    %cst_23 = arith.constant dense<0.000000e+00> : vector<8x32xf32>
    %69 = tpu.matmul %60, %11, %cst_23 {dimension_numbers = #tpu.dot_dimension_numbers<[1], [0], [0], [1], [0, 0, 1, 1], [], []>} : vector<8x32xf32>, vector<32x32xf32>, vector<8x32xf32> -> vector<8x32xf32>
    %70 = arith.addf %68, %69 : vector<8x32xf32>
    %71 = math.tanh %70 : vector<8x32xf32>
    %72 = arith.select %67, %71, %60 : vector<8x32xi1>, vector<8x32xf32>
    %73 = tpu.concatenate %72, %65 in 1 : vector<8x32xf32>, vector<8x32xf32> -> vector<8x64xf32>
    %cst_24 = arith.constant dense<0.000000e+00> : vector<8x32xf32>
    %74 = tpu.matmul %73, %12, %cst_24 {dimension_numbers = #tpu.dot_dimension_numbers<[1], [0], [0], [1], [0, 0, 1, 1], [], []>} : vector<8x64xf32>, vector<64x32xf32>, vector<8x32xf32> -> vector<8x32xf32>
    %75 = arith.addf %74, %15 : vector<8x32xf32>
    %76 = math.tanh %75 : vector<8x32xf32>
    %77 = arith.select %67, %76, %65 : vector<8x32xi1>, vector<8x32xf32>
    %78 = vector.extract_strided_slice %10 {offsets = [5, 0, 0], sizes = [1, 8, 32], strides = [1, 1, 1]} : vector<8x8x32xi1> to vector<1x8x32xi1>
    %79 = vector.shape_cast %78 : vector<1x8x32xi1> to vector<8x32xi1>
    %80 = vector.extract_strided_slice %5 {offsets = [40, 0], sizes = [8, 32], strides = [1, 1]} : vector<64x32xf32> to vector<8x32xf32>
    %cst_25 = arith.constant dense<0.000000e+00> : vector<8x32xf32>
    %81 = tpu.matmul %72, %11, %cst_25 {dimension_numbers = #tpu.dot_dimension_numbers<[1], [0], [0], [1], [0, 0, 1, 1], [], []>} : vector<8x32xf32>, vector<32x32xf32>, vector<8x32xf32> -> vector<8x32xf32>
    %82 = arith.addf %80, %81 : vector<8x32xf32>
    %83 = math.tanh %82 : vector<8x32xf32>
    %84 = arith.select %79, %83, %72 : vector<8x32xi1>, vector<8x32xf32>
    %85 = tpu.concatenate %84, %77 in 1 : vector<8x32xf32>, vector<8x32xf32> -> vector<8x64xf32>
    %cst_26 = arith.constant dense<0.000000e+00> : vector<8x32xf32>
    %86 = tpu.matmul %85, %12, %cst_26 {dimension_numbers = #tpu.dot_dimension_numbers<[1], [0], [0], [1], [0, 0, 1, 1], [], []>} : vector<8x64xf32>, vector<64x32xf32>, vector<8x32xf32> -> vector<8x32xf32>
    %87 = arith.addf %86, %15 : vector<8x32xf32>
    %88 = math.tanh %87 : vector<8x32xf32>
    %89 = arith.select %79, %88, %77 : vector<8x32xi1>, vector<8x32xf32>
    %90 = vector.extract_strided_slice %10 {offsets = [6, 0, 0], sizes = [1, 8, 32], strides = [1, 1, 1]} : vector<8x8x32xi1> to vector<1x8x32xi1>
    %91 = vector.shape_cast %90 : vector<1x8x32xi1> to vector<8x32xi1>
    %92 = vector.extract_strided_slice %5 {offsets = [48, 0], sizes = [8, 32], strides = [1, 1]} : vector<64x32xf32> to vector<8x32xf32>
    %cst_27 = arith.constant dense<0.000000e+00> : vector<8x32xf32>
    %93 = tpu.matmul %84, %11, %cst_27 {dimension_numbers = #tpu.dot_dimension_numbers<[1], [0], [0], [1], [0, 0, 1, 1], [], []>} : vector<8x32xf32>, vector<32x32xf32>, vector<8x32xf32> -> vector<8x32xf32>
    %94 = arith.addf %92, %93 : vector<8x32xf32>
    %95 = math.tanh %94 : vector<8x32xf32>
    %96 = arith.select %91, %95, %84 : vector<8x32xi1>, vector<8x32xf32>
    %97 = tpu.concatenate %96, %89 in 1 : vector<8x32xf32>, vector<8x32xf32> -> vector<8x64xf32>
    %cst_28 = arith.constant dense<0.000000e+00> : vector<8x32xf32>
    %98 = tpu.matmul %97, %12, %cst_28 {dimension_numbers = #tpu.dot_dimension_numbers<[1], [0], [0], [1], [0, 0, 1, 1], [], []>} : vector<8x64xf32>, vector<64x32xf32>, vector<8x32xf32> -> vector<8x32xf32>
    %99 = arith.addf %98, %15 : vector<8x32xf32>
    %100 = math.tanh %99 : vector<8x32xf32>
    %101 = arith.select %91, %100, %89 : vector<8x32xi1>, vector<8x32xf32>
    %102 = vector.extract_strided_slice %10 {offsets = [7, 0, 0], sizes = [1, 8, 32], strides = [1, 1, 1]} : vector<8x8x32xi1> to vector<1x8x32xi1>
    %103 = vector.shape_cast %102 : vector<1x8x32xi1> to vector<8x32xi1>
    %104 = vector.extract_strided_slice %5 {offsets = [56, 0], sizes = [8, 32], strides = [1, 1]} : vector<64x32xf32> to vector<8x32xf32>
    %cst_29 = arith.constant dense<0.000000e+00> : vector<8x32xf32>
    %105 = tpu.matmul %96, %11, %cst_29 {dimension_numbers = #tpu.dot_dimension_numbers<[1], [0], [0], [1], [0, 0, 1, 1], [], []>} : vector<8x32xf32>, vector<32x32xf32>, vector<8x32xf32> -> vector<8x32xf32>
    %106 = arith.addf %104, %105 : vector<8x32xf32>
    %107 = math.tanh %106 : vector<8x32xf32>
    %108 = arith.select %103, %107, %96 : vector<8x32xi1>, vector<8x32xf32>
    %109 = tpu.concatenate %108, %101 in 1 : vector<8x32xf32>, vector<8x32xf32> -> vector<8x64xf32>
    %cst_30 = arith.constant dense<0.000000e+00> : vector<8x32xf32>
    %110 = tpu.matmul %109, %12, %cst_30 {dimension_numbers = #tpu.dot_dimension_numbers<[1], [0], [0], [1], [0, 0, 1, 1], [], []>} : vector<8x64xf32>, vector<64x32xf32>, vector<8x32xf32> -> vector<8x32xf32>
    %111 = arith.addf %110, %15 : vector<8x32xf32>
    %112 = math.tanh %111 : vector<8x32xf32>
    %113 = arith.select %103, %112, %101 : vector<8x32xi1>, vector<8x32xf32>
    %c0_31 = arith.constant 0 : index
    %c0_32 = arith.constant 0 : index
    %114 = vector.load %arg7[%c0_31, %c0_32] : memref<32x8xf32, #tpu.memory_space<vmem>>, vector<32x8xf32>
    %cst_33 = arith.constant dense<0.000000e+00> : vector<8x8xf32>
    %115 = tpu.matmul %113, %114, %cst_33 {dimension_numbers = #tpu.dot_dimension_numbers<[1], [0], [0], [1], [0, 0, 1, 1], [], []>} : vector<8x32xf32>, vector<32x8xf32>, vector<8x8xf32> -> vector<8x8xf32>
    %c0_34 = arith.constant 0 : index
    %c0_35 = arith.constant 0 : index
    %116 = vector.load %arg8[%c0_34, %c0_35] : memref<1x8xf32, #tpu.memory_space<vmem>>, vector<1x8xf32>
    %117 = vector.broadcast %116 : vector<1x8xf32> to vector<8x8xf32>
    %118 = arith.addf %115, %117 : vector<8x8xf32>
    %c0_36 = arith.constant 0 : index
    %c0_37 = arith.constant 0 : index
    %119 = vector.load %arg9[%c0_36, %c0_37] : memref<8x8xf32, #tpu.memory_space<vmem>>, vector<8x8xf32>
    tpu.vector_store %arg9[%c0_36, %c0_37], %118 {strides = array<i32>} : memref<8x8xf32, #tpu.memory_space<vmem>>, vector<8x8xf32>,
    return
  }
}

</mosaic_0001>

<llo_original>
// kernel: tpu_custom_call.1
$region0: #{tpu_custom_call.1}
  #allocation0 [shape = 'u32[]', space=smem, size = 0x4, offset = 0x4, fixed_abs, tag = 'smem constant byte address 0x4 - core index']
  #allocation1 [shape = 'u32[144,128]{1,0:T(1,128)}', space=vmem, size = 0x12000, scoped, tag = 'internal scratch']
  %s0 = inlined_call_operand.vmem [shape: f32[64,16], index: 0, kind: input, shape index: {}]
  %s1 = inlined_call_operand.vmem [shape: s32[8,1], index: 1, kind: input, shape index: {}]
  %s2 = inlined_call_operand.vmem [shape: f32[16,32], index: 2, kind: input, shape index: {}]
  %s3 = inlined_call_operand.vmem [shape: f32[32,32], index: 3, kind: input, shape index: {}]
  %s4 = inlined_call_operand.vmem [shape: f32[1,32], index: 4, kind: input, shape index: {}]
  %s5 = inlined_call_operand.vmem [shape: f32[64,32], index: 5, kind: input, shape index: {}]
  %s6 = inlined_call_operand.vmem [shape: f32[1,32], index: 6, kind: input, shape index: {}]
  %s7 = inlined_call_operand.vmem [shape: f32[32,8], index: 7, kind: input, shape index: {}]
  %s8 = inlined_call_operand.vmem [shape: f32[1,8], index: 8, kind: input, shape index: {}]
  %s9 = inlined_call_operand.hbm [shape: f32[8,8], index: 9, kind: output, shape index: {}]
  %s10 = sld [smem:[#allocation0]]
  $region46: #{tpu_custom_call.1} parent=0
    _
  %s12 = ssub.s32 1, %s10
  %s13 = scalar_select 0, %s12, %s10
  $region1: #{tpu_custom_call.1} parent=0
    #allocation2 [shape = 'u8[4096]{0}', space=vmem, size = 0x1000, scoped, tag = 'output window, operand 0, single buffered']
    #allocation3 [shape = 's32[1]{0}', space=sflag, size = 0x4, scoped, tag = 'scoped memory for tpu_custom_call.1']
    %14 = vsyncpa [#allocation3], 0
    // Predicated region
    $region2: #{tpu_custom_call.1} parent=1 // pred_check
      _
    $region3: #{tpu_custom_call.1} parent=1 // pred_check_branch
      %16 = sbr.rel (0) target = $region5
    $region4: #{tpu_custom_call.1} parent=1 // pred_region
      _
    $region5: #{tpu_custom_call.1} parent=1 // pred_fallthru
      _
    // Predicated region
    $region6: #{tpu_custom_call.1} parent=1 // pred_check
      _
    $region7: #{tpu_custom_call.1} parent=1 // pred_check_branch
      %18 = sbr.rel (0) target = $region9
    $region8: #{tpu_custom_call.1} parent=1 // pred_region
      _
    $region9: #{tpu_custom_call.1} parent=1 // pred_fallthru
      _
    // Predicated region
    $region10: #{tpu_custom_call.1} parent=1 // pred_check
      _
    $region11: #{tpu_custom_call.1} parent=1 // pred_check_branch
      %20 = sbr.rel (0) target = $region13
    $region12: #{tpu_custom_call.1} parent=1 // pred_region
      _
    $region13: #{tpu_custom_call.1} parent=1 // pred_fallthru
      _
    // Predicated region
    $region14: #{tpu_custom_call.1} parent=1 // pred_check
      _
    $region15: #{tpu_custom_call.1} parent=1 // pred_check_branch
      %22 = sbr.rel (0) target = $region17
    $region16: #{tpu_custom_call.1} parent=1 // pred_region
      _
    $region17: #{tpu_custom_call.1} parent=1 // pred_fallthru
      _
    // Predicated region
    $region18: #{tpu_custom_call.1} parent=1 // pred_check
      _
    $region19: #{tpu_custom_call.1} parent=1 // pred_check_branch
      %24 = sbr.rel (0) target = $region21
    $region20: #{tpu_custom_call.1} parent=1 // pred_region
      _
    $region21: #{tpu_custom_call.1} parent=1 // pred_fallthru
      _
    // Predicated region
    $region22: #{tpu_custom_call.1} parent=1 // pred_check
      _
    $region23: #{tpu_custom_call.1} parent=1 // pred_check_branch
      %26 = sbr.rel (0) target = $region25
    $region24: #{tpu_custom_call.1} parent=1 // pred_region
      _
    $region25: #{tpu_custom_call.1} parent=1 // pred_fallthru
      _
    // Predicated region
    $region26: #{tpu_custom_call.1} parent=1 // pred_check
      _
    $region27: #{tpu_custom_call.1} parent=1 // pred_check_branch
      %28 = sbr.rel (0) target = $region29
    $region28: #{tpu_custom_call.1} parent=1 // pred_region
      _
    $region29: #{tpu_custom_call.1} parent=1 // pred_fallthru
      _
    // Predicated region
    $region30: #{tpu_custom_call.1} parent=1 // pred_check
      _
    $region31: #{tpu_custom_call.1} parent=1 // pred_check_branch
      %30 = sbr.rel (0) target = $region33
    $region32: #{tpu_custom_call.1} parent=1 // pred_region
      _
    $region33: #{tpu_custom_call.1} parent=1 // pred_fallthru
      _
    // Predicated region
    $region34: #{tpu_custom_call.1} parent=1 // pred_check
      _
    $region35: #{tpu_custom_call.1} parent=1 // pred_check_branch
      %32 = sbr.rel (0) target = $region37
    $region36: #{tpu_custom_call.1} parent=1 // pred_region
      _
    $region37: #{tpu_custom_call.1} parent=1 // pred_fallthru
      _
    %v33 = vld [vmem:[%s0] sm:$0xff]
    %v34 = vld [vmem:[%s0 + $0x8] sm:$0xff]
    %v35 = vld [vmem:[%s0 + $0x10] sm:$0xff]
    %v36 = vld [vmem:[%s0 + $0x18] sm:$0xff]
    %v37 = vld [vmem:[%s0 + $0x20] sm:$0xff]
    %v38 = vld [vmem:[%s0 + $0x28] sm:$0xff]
    %v39 = vld [vmem:[%s0 + $0x30] sm:$0xff]
    %v40 = vld [vmem:[%s0 + $0x38] sm:$0xff]
    %v41 = vld [vmem:[%s2] sm:$0xff]
    %v42 = vld [vmem:[%s2 + $0x8] sm:$0xff]
    %v43 = vld [vmem:[%s4] sm:$0x1]
    %v45 = vlaneseq
    %v46 = vshrl.u32 %v45, 7
    %v47 = vsub.s32 0, %v46
    %v48 = vrot.slane %v43, %v47
    %vm50 = vcmask 130048
    %v52 = vsel %vm50, %v33, 0
    %v55 = vsel %vm50, %v34, 0
    %v58 = vsel %vm50, %v35, 0
    %v61 = vsel %vm50, %v36, 0
    %v64 = vsel %vm50, %v37, 0
    %v67 = vsel %vm50, %v38, 0
    %v70 = vsel %vm50, %v39, 0
    %v73 = vsel %vm50, %v40, 0
    %75 = vmatprep.subr.mxu0 0.0
    %76 = vmatpush1.msra.mxu0 %v41
    %77 = vmatprep.subr.mxu0 0.0
    %78 = vmatpush1.msra.mxu0 %v42
    %79 = vmatprep.subr.mxu0 0.0
    %80 = vmatpush1.msra.mxu0 0.0
    %81 = vmatprep.subr.mxu0 0.0
    %82 = vmatpush1.msra.mxu0 0.0
    %83 = vmatprep.subr.mxu0 0.0
    %84 = vmatpush1.msra.mxu0 0.0
    %85 = vmatprep.subr.mxu0 0.0
    %86 = vmatpush1.msra.mxu0 0.0
    %87 = vmatprep.subr.mxu0 0.0
    %88 = vmatpush1.msra.mxu0 0.0
    %89 = vmatprep.subr.mxu0 0.0
    %90 = vmatpush1.msra.mxu0 0.0
    %91 = vmatprep.subr.mxu0 0.0
    %92 = vmatpush1.msra.mxu0 0.0
    %93 = vmatprep.subr.mxu0 0.0
    %94 = vmatpush1.msra.mxu0 0.0
    %95 = vmatprep.subr.mxu0 0.0
    %96 = vmatpush1.msra.mxu0 0.0
    %97 = vmatprep.subr.mxu0 0.0
    %98 = vmatpush1.msra.mxu0 0.0
    %99 = vmatprep.subr.mxu0 0.0
    %100 = vmatpush1.msra.mxu0 0.0
    %101 = vmatprep.subr.mxu0 0.0
    %102 = vmatpush1.msra.mxu0 0.0
    %103 = vmatprep.subr.mxu0 0.0
    %104 = vmatpush1.msra.mxu0 0.0
    %105 = vmatprep.subr.mxu0 0.0
    %106 = vmatpush1.msra.mxu0 0.0
    %107 = vmatprep.subr.mxu0 0.0
    %108 = vmatpush1.msra.mxu0 0.0
    %109 = vmatprep.subr.mxu0 0.0
    %110 = vmatpush1.msra.mxu0 0.0
    %111 = vmatprep.subr.mxu0 0.0
    %112 = vmatpush1.msra.mxu0 0.0
    %113 = vmatprep.subr.mxu0 0.0
    %114 = vmatpush1.msra.mxu0 0.0
    %115 = vmatprep.subr.mxu0 0.0
    %116 = vmatpush1.msra.mxu0 0.0
    %117 = vmatprep.subr.mxu0 0.0
    %118 = vmatpush1.msra.mxu0 0.0
    %119 = vmatprep.subr.mxu0 0.0
    %120 = vmatpush1.msra.mxu0 0.0
    %121 = vmatprep.subr.mxu0 0.0
    %122 = vmatpush1.msra.mxu0 0.0
    %123 = vmatprep.subr.mxu0 0.0
    %124 = vmatpush1.msra.mxu0 0.0
    %125 = vmatprep.subr.mxu0 0.0
    %126 = vmatpush1.msra.mxu0 0.0
    %127 = vmatprep.subr.mxu0 0.0
    %128 = vmatpush1.msra.mxu0 0.0
    %129 = vmatprep.subr.mxu0 0.0
    %130 = vmatpush1.msra.mxu0 0.0
    %131 = vmatprep.subr.mxu0 0.0
    %132 = vmatpush1.msra.mxu0 0.0
    %133 = vmatprep.subr.mxu0 0.0
    %134 = vmatpush1.msra.mxu0 0.0
    %135 = vmatprep.subr.mxu0 0.0
    %136 = vmatpush1.msra.mxu0 0.0
    %137 = vmatprep.subr.mxu0 0.0
    %138 = vmatpush1.msra.mxu0 0.0
    %139 = vmatprep.mubr.f32.mxu0 0.0
    %140 = vmatmul.mubr.f32.gmra.mrb[0].mxu0 %v52
    %v141 = vpop.f32.mrb[0].mxu0
    %v142 = vadd.f32 %v48, %v141
    %v143 = vpop.f32.mrb[0].mxu0
    %144 = vmatprep.mubr.f32.mxu0 0.0
    %145 = vmatmul.mubr.f32.gmra.mrb[0].mxu0 %v55
    %v146 = vpop.f32.mrb[0].mxu0
    %v147 = vadd.f32 %v48, %v146
    %v148 = vpop.f32.mrb[0].mxu0
    %149 = vmatprep.mubr.f32.mxu0 0.0
    %150 = vmatmul.mubr.f32.gmra.mrb[0].mxu0 %v58
    %v151 = vpop.f32.mrb[0].mxu0
    %v152 = vadd.f32 %v48, %v151
    %v153 = vpop.f32.mrb[0].mxu0
    %154 = vmatprep.mubr.f32.mxu0 0.0
    %155 = vmatmul.mubr.f32.gmra.mrb[0].mxu0 %v61
    %v156 = vpop.f32.mrb[0].mxu0
    %v157 = vadd.f32 %v48, %v156
    %v158 = vpop.f32.mrb[0].mxu0
    %159 = vmatprep.mubr.f32.mxu0 0.0
    %160 = vmatmul.mubr.f32.gmra.mrb[0].mxu0 %v64
    %v161 = vpop.f32.mrb[0].mxu0
    %v162 = vadd.f32 %v48, %v161
    %v163 = vpop.f32.mrb[0].mxu0
    %164 = vmatprep.mubr.f32.mxu0 0.0
    %165 = vmatmul.mubr.f32.gmra.mrb[0].mxu0 %v67
    %v166 = vpop.f32.mrb[0].mxu0
    %v167 = vadd.f32 %v48, %v166
    %v168 = vpop.f32.mrb[0].mxu0
    %169 = vmatprep.mubr.f32.mxu0 0.0
    %170 = vmatmul.mubr.f32.gmra.mrb[0].mxu0 %v70
    %v171 = vpop.f32.mrb[0].mxu0
    %v172 = vadd.f32 %v48, %v171
    %v173 = vpop.f32.mrb[0].mxu0
    %174 = vmatprep.mubr.f32.mxu0 0.0
    %175 = vmatmul.mubr.f32.gmra.mrb[0].mxu0 %v73
    %v176 = vpop.f32.mrb[0].mxu0
    %v177 = vadd.f32 %v48, %v176
    %v178 = vpop.f32.mrb[0].mxu0
    %179 = vdwg.mxu0
    %v180 = vld [vmem:[%s1] sm:$0xff]
    %181 = vset.pattern.permute.xlu0 0
    %182 = vperm.xlu0 %181, %v180
    %v183 = vpop.permute.xlu0 %182
    %vm184 = vcmp.gt.s32.totalorder %v183, 0
    %vm185 = vcmp.gt.s32.totalorder %v183, 1
    %vm186 = vcmp.gt.s32.totalorder %v183, 2
    %vm187 = vcmp.gt.s32.totalorder %v183, 3
    %vm188 = vcmp.gt.s32.totalorder %v183, 4
    %vm189 = vcmp.gt.s32.totalorder %v183, 5
    %vm190 = vcmp.gt.s32.totalorder %v183, 6
    %vm191 = vcmp.gt.s32.totalorder %v183, 7
    %v192 = vld [vmem:[%s3] sm:$0xff]
    %v193 = vld [vmem:[%s3 + $0x8] sm:$0xff]
    %v194 = vld [vmem:[%s3 + $0x10] sm:$0xff]
    %v195 = vld [vmem:[%s3 + $0x18] sm:$0xff]
    %v196 = vld [vmem:[%s5] sm:$0xff]
    %v197 = vld [vmem:[%s5 + $0x8] sm:$0xff]
    %v198 = vld [vmem:[%s5 + $0x10] sm:$0xff]
    %v199 = vld [vmem:[%s5 + $0x18] sm:$0xff]
    %v200 = vld [vmem:[%s5 + $0x20] sm:$0xff]
    %v201 = vld [vmem:[%s5 + $0x28] sm:$0xff]
    %v202 = vld [vmem:[%s5 + $0x30] sm:$0xff]
    %v203 = vld [vmem:[%s5 + $0x38] sm:$0xff]
    %v204 = vld [vmem:[%s6] sm:$0x1]
    %v206 = vlaneseq
    %v207 = vshrl.u32 %v206, 7
    %v208 = vsub.s32 0, %v207
    %v209 = vrot.slane %v204, %v208
    %vm211 = vcmask 261120
    %v213 = vsel %vm211, 0.0, 0
    %215 = vmatprep.subr.mxu0 0.0
    %216 = vmatpush1.msra.mxu0 %v192
    %217 = vmatprep.subr.mxu0 0.0
    %218 = vmatpush1.msra.mxu0 %v193
    %219 = vmatprep.subr.mxu0 0.0
    %220 = vmatpush1.msra.mxu0 %v194
    %221 = vmatprep.subr.mxu0 0.0
    %222 = vmatpush1.msra.mxu0 %v195
    %223 = vmatprep.subr.mxu0 0.0
    %224 = vmatpush1.msra.mxu0 0.0
    %225 = vmatprep.subr.mxu0 0.0
    %226 = vmatpush1.msra.mxu0 0.0
    %227 = vmatprep.subr.mxu0 0.0
    %228 = vmatpush1.msra.mxu0 0.0
    %229 = vmatprep.subr.mxu0 0.0
    %230 = vmatpush1.msra.mxu0 0.0
    %231 = vmatprep.subr.mxu0 0.0
    %232 = vmatpush1.msra.mxu0 0.0
    %233 = vmatprep.subr.mxu0 0.0
    %234 = vmatpush1.msra.mxu0 0.0
    %235 = vmatprep.subr.mxu0 0.0
    %236 = vmatpush1.msra.mxu0 0.0
    %237 = vmatprep.subr.mxu0 0.0
    %238 = vmatpush1.msra.mxu0 0.0
    %239 = vmatprep.subr.mxu0 0.0
    %240 = vmatpush1.msra.mxu0 0.0
    %241 = vmatprep.subr.mxu0 0.0
    %242 = vmatpush1.msra.mxu0 0.0
    %243 = vmatprep.subr.mxu0 0.0
    %244 = vmatpush1.msra.mxu0 0.0
    %245 = vmatprep.subr.mxu0 0.0
    %246 = vmatpush1.msra.mxu0 0.0
    %247 = vmatprep.subr.mxu0 0.0
    %248 = vmatpush1.msra.mxu0 0.0
    %249 = vmatprep.subr.mxu0 0.0
    %250 = vmatpush1.msra.mxu0 0.0
    %251 = vmatprep.subr.mxu0 0.0
    %252 = vmatpush1.msra.mxu0 0.0
    %253 = vmatprep.subr.mxu0 0.0
    %254 = vmatpush1.msra.mxu0 0.0
    %255 = vmatprep.subr.mxu0 0.0
    %256 = vmatpush1.msra.mxu0 0.0
    %257 = vmatprep.subr.mxu0 0.0
    %258 = vmatpush1.msra.mxu0 0.0
    %259 = vmatprep.subr.mxu0 0.0
    %260 = vmatpush1.msra.mxu0 0.0
    %261 = vmatprep.subr.mxu0 0.0
    %262 = vmatpush1.msra.mxu0 0.0
    %263 = vmatprep.subr.mxu0 0.0
    %264 = vmatpush1.msra.mxu0 0.0
    %265 = vmatprep.subr.mxu0 0.0
    %266 = vmatpush1.msra.mxu0 0.0
    %267 = vmatprep.subr.mxu0 0.0
    %268 = vmatpush1.msra.mxu0 0.0
    %269 = vmatprep.subr.mxu0 0.0
    %270 = vmatpush1.msra.mxu0 0.0
    %271 = vmatprep.subr.mxu0 0.0
    %272 = vmatpush1.msra.mxu0 0.0
    %273 = vmatprep.subr.mxu0 0.0
    %274 = vmatpush1.msra.mxu0 0.0
    %275 = vmatprep.subr.mxu0 0.0
    %276 = vmatpush1.msra.mxu0 0.0
    %277 = vmatprep.subr.mxu0 0.0
    %278 = vmatpush1.msra.mxu0 0.0
    %279 = vmatprep.mubr.f32.mxu0 0.0
    %280 = vmatmul.mubr.f32.gmra.mrb[0].mxu0 %v213
    %v281 = vpop.f32.mrb[0].mxu0
    %v282 = vadd.f32 0.0, %v281
    %v283 = vpop.f32.mrb[0].mxu0
    %284 = vdwg.mxu0
    %v285 = vadd.f32 %v142, %v282
    %v286 = vtanh.pop %v285
    %v287 = vsel %vm184, %v286, 0.0
    %v288 = vsel %vm211, %v287, 0.0
    %vm289 = vcmask 523264
    %v291 = vsel %vm289, %v288, 0
    %293 = vmatprep.subr.mxu0 0.0
    %294 = vmatpush1.msra.mxu0 %v196
    %295 = vmatprep.subr.mxu0 0.0
    %296 = vmatpush1.msra.mxu0 %v197
    %297 = vmatprep.subr.mxu0 0.0
    %298 = vmatpush1.msra.mxu0 %v198
    %299 = vmatprep.subr.mxu0 0.0
    %300 = vmatpush1.msra.mxu0 %v199
    %301 = vmatprep.subr.mxu0 0.0
    %302 = vmatpush1.msra.mxu0 %v200
    %303 = vmatprep.subr.mxu0 0.0
    %304 = vmatpush1.msra.mxu0 %v201
    %305 = vmatprep.subr.mxu0 0.0
    %306 = vmatpush1.msra.mxu0 %v202
    %307 = vmatprep.subr.mxu0 0.0
    %308 = vmatpush1.msra.mxu0 %v203
    %309 = vmatprep.subr.mxu0 0.0
    %310 = vmatpush1.msra.mxu0 0.0
    %311 = vmatprep.subr.mxu0 0.0
    %312 = vmatpush1.msra.mxu0 0.0
    %313 = vmatprep.subr.mxu0 0.0
    %314 = vmatpush1.msra.mxu0 0.0
    %315 = vmatprep.subr.mxu0 0.0
    %316 = vmatpush1.msra.mxu0 0.0
    %317 = vmatprep.subr.mxu0 0.0
    %318 = vmatpush1.msra.mxu0 0.0
    %319 = vmatprep.subr.mxu0 0.0
    %320 = vmatpush1.msra.mxu0 0.0
    %321 = vmatprep.subr.mxu0 0.0
    %322 = vmatpush1.msra.mxu0 0.0
    %323 = vmatprep.subr.mxu0 0.0
    %324 = vmatpush1.msra.mxu0 0.0
    %325 = vmatprep.subr.mxu0 0.0
    %326 = vmatpush1.msra.mxu0 0.0
    %327 = vmatprep.subr.mxu0 0.0
    %328 = vmatpush1.msra.mxu0 0.0
    %329 = vmatprep.subr.mxu0 0.0
    %330 = vmatpush1.msra.mxu0 0.0
    %331 = vmatprep.subr.mxu0 0.0
    %332 = vmatpush1.msra.mxu0 0.0
    %333 = vmatprep.subr.mxu0 0.0
    %334 = vmatpush1.msra.mxu0 0.0
    %335 = vmatprep.subr.mxu0 0.0
    %336 = vmatpush1.msra.mxu0 0.0
    %337 = vmatprep.subr.mxu0 0.0
    %338 = vmatpush1.msra.mxu0 0.0
    %339 = vmatprep.subr.mxu0 0.0
    %340 = vmatpush1.msra.mxu0 0.0
    %341 = vmatprep.subr.mxu0 0.0
    %342 = vmatpush1.msra.mxu0 0.0
    %343 = vmatprep.subr.mxu0 0.0
    %344 = vmatpush1.msra.mxu0 0.0
    %345 = vmatprep.subr.mxu0 0.0
    %346 = vmatpush1.msra.mxu0 0.0
    %347 = vmatprep.subr.mxu0 0.0
    %348 = vmatpush1.msra.mxu0 0.0
    %349 = vmatprep.subr.mxu0 0.0
    %350 = vmatpush1.msra.mxu0 0.0
    %351 = vmatprep.subr.mxu0 0.0
    %352 = vmatpush1.msra.mxu0 0.0
    %353 = vmatprep.subr.mxu0 0.0
    %354 = vmatpush1.msra.mxu0 0.0
    %355 = vmatprep.subr.mxu0 0.0
    %356 = vmatpush1.msra.mxu0 0.0
    %357 = vmatprep.mubr.f32.mxu0 0.0
    %358 = vmatmul.mubr.f32.gmra.mrb[0].mxu0 %v291
    %v359 = vpop.f32.mrb[0].mxu0
    %v360 = vadd.f32 %v209, %v359
    %v361 = vpop.f32.mrb[0].mxu0
    %362 = vdwg.mxu0
    %v363 = vtanh.pop %v360
    %v364 = vsel %vm184, %v363, 0.0
    %v366 = vsel %vm211, %v287, 0
    %368 = vmatprep.subr.mxu0 0.0
    %369 = vmatpush1.msra.mxu0 %v192
    %370 = vmatprep.subr.mxu0 0.0
    %371 = vmatpush1.msra.mxu0 %v193
    %372 = vmatprep.subr.mxu0 0.0
    %373 = vmatpush1.msra.mxu0 %v194
    %374 = vmatprep.subr.mxu0 0.0
    %375 = vmatpush1.msra.mxu0 %v195
    %376 = vmatprep.subr.mxu0 0.0
    %377 = vmatpush1.msra.mxu0 0.0
    %378 = vmatprep.subr.mxu0 0.0
    %379 = vmatpush1.msra.mxu0 0.0
    %380 = vmatprep.subr.mxu0 0.0
    %381 = vmatpush1.msra.mxu0 0.0
    %382 = vmatprep.subr.mxu0 0.0
    %383 = vmatpush1.msra.mxu0 0.0
    %384 = vmatprep.subr.mxu0 0.0
    %385 = vmatpush1.msra.mxu0 0.0
    %386 = vmatprep.subr.mxu0 0.0
    %387 = vmatpush1.msra.mxu0 0.0
    %388 = vmatprep.subr.mxu0 0.0
    %389 = vmatpush1.msra.mxu0 0.0
    %390 = vmatprep.subr.mxu0 0.0
    %391 = vmatpush1.msra.mxu0 0.0
    %392 = vmatprep.subr.mxu0 0.0
    %393 = vmatpush1.msra.mxu0 0.0
    %394 = vmatprep.subr.mxu0 0.0
    %395 = vmatpush1.msra.mxu0 0.0
    %396 = vmatprep.subr.mxu0 0.0
    %397 = vmatpush1.msra.mxu0 0.0
    %398 = vmatprep.subr.mxu0 0.0
    %399 = vmatpush1.msra.mxu0 0.0
    %400 = vmatprep.subr.mxu0 0.0
    %401 = vmatpush1.msra.mxu0 0.0
    %402 = vmatprep.subr.mxu0 0.0
    %403 = vmatpush1.msra.mxu0 0.0
    %404 = vmatprep.subr.mxu0 0.0
    %405 = vmatpush1.msra.mxu0 0.0
    %406 = vmatprep.subr.mxu0 0.0
    %407 = vmatpush1.msra.mxu0 0.0
    %408 = vmatprep.subr.mxu0 0.0
    %409 = vmatpush1.msra.mxu0 0.0
    %410 = vmatprep.subr.mxu0 0.0
    %411 = vmatpush1.msra.mxu0 0.0
    %412 = vmatprep.subr.mxu0 0.0
    %413 = vmatpush1.msra.mxu0 0.0
    %414 = vmatprep.subr.mxu0 0.0
    %415 = vmatpush1.msra.mxu0 0.0
    %416 = vmatprep.subr.mxu0 0.0
    %417 = vmatpush1.msra.mxu0 0.0
    %418 = vmatprep.subr.mxu0 0.0
    %419 = vmatpush1.msra.mxu0 0.0
    %420 = vmatprep.subr.mxu0 0.0
    %421 = vmatpush1.msra.mxu0 0.0
    %422 = vmatprep.subr.mxu0 0.0
    %423 = vmatpush1.msra.mxu0 0.0
    %424 = vmatprep.subr.mxu0 0.0
    %425 = vmatpush1.msra.mxu0 0.0
    %426 = vmatprep.subr.mxu0 0.0
    %427 = vmatpush1.msra.mxu0 0.0
    %428 = vmatprep.subr.mxu0 0.0
    %429 = vmatpush1.msra.mxu0 0.0
    %430 = vmatprep.subr.mxu0 0.0
    %431 = vmatpush1.msra.mxu0 0.0
    %432 = vmatprep.mubr.f32.mxu0 0.0
    %433 = vmatmul.mubr.f32.gmra.mrb[0].mxu0 %v366
    %v434 = vpop.f32.mrb[0].mxu0
    %v435 = vadd.f32 0.0, %v434
    %v436 = vpop.f32.mrb[0].mxu0
    %437 = vdwg.mxu0
    %v438 = vadd.f32 %v147, %v435
    %v439 = vtanh.pop %v438
    %v440 = vsel %vm185, %v439, %v287
    %442 = vrot.lane.b32.xlu0 %v364, 32
    %v443 = vpop.permute.xlu0 %442
    %v445 = vsel %vm211, %v440, %v443
    %v447 = vsel %vm289, %v445, 0
    %449 = vmatprep.subr.mxu0 0.0
    %450 = vmatpush1.msra.mxu0 %v196
    %451 = vmatprep.subr.mxu0 0.0
    %452 = vmatpush1.msra.mxu0 %v197
    %453 = vmatprep.subr.mxu0 0.0
    %454 = vmatpush1.msra.mxu0 %v198
    %455 = vmatprep.subr.mxu0 0.0
    %456 = vmatpush1.msra.mxu0 %v199
    %457 = vmatprep.subr.mxu0 0.0
    %458 = vmatpush1.msra.mxu0 %v200
    %459 = vmatprep.subr.mxu0 0.0
    %460 = vmatpush1.msra.mxu0 %v201
    %461 = vmatprep.subr.mxu0 0.0
    %462 = vmatpush1.msra.mxu0 %v202
    %463 = vmatprep.subr.mxu0 0.0
    %464 = vmatpush1.msra.mxu0 %v203
    %465 = vmatprep.subr.mxu0 0.0
    %466 = vmatpush1.msra.mxu0 0.0
    %467 = vmatprep.subr.mxu0 0.0
    %468 = vmatpush1.msra.mxu0 0.0
    %469 = vmatprep.subr.mxu0 0.0
    %470 = vmatpush1.msra.mxu0 0.0
    %471 = vmatprep.subr.mxu0 0.0
    %472 = vmatpush1.msra.mxu0 0.0
    %473 = vmatprep.subr.mxu0 0.0
    %474 = vmatpush1.msra.mxu0 0.0
    %475 = vmatprep.subr.mxu0 0.0
    %476 = vmatpush1.msra.mxu0 0.0
    %477 = vmatprep.subr.mxu0 0.0
    %478 = vmatpush1.msra.mxu0 0.0
    %479 = vmatprep.subr.mxu0 0.0
    %480 = vmatpush1.msra.mxu0 0.0
    %481 = vmatprep.subr.mxu0 0.0
    %482 = vmatpush1.msra.mxu0 0.0
    %483 = vmatprep.subr.mxu0 0.0
    %484 = vmatpush1.msra.mxu0 0.0
    %485 = vmatprep.subr.mxu0 0.0
    %486 = vmatpush1.msra.mxu0 0.0
    %487 = vmatprep.subr.mxu0 0.0
    %488 = vmatpush1.msra.mxu0 0.0
    %489 = vmatprep.subr.mxu0 0.0
    %490 = vmatpush1.msra.mxu0 0.0
    %491 = vmatprep.subr.mxu0 0.0
    %492 = vmatpush1.msra.mxu0 0.0
    %493 = vmatprep.subr.mxu0 0.0
    %494 = vmatpush1.msra.mxu0 0.0
    %495 = vmatprep.subr.mxu0 0.0
    %496 = vmatpush1.msra.mxu0 0.0
    %497 = vmatprep.subr.mxu0 0.0
    %498 = vmatpush1.msra.mxu0 0.0
    %499 = vmatprep.subr.mxu0 0.0
    %500 = vmatpush1.msra.mxu0 0.0
    %501 = vmatprep.subr.mxu0 0.0
    %502 = vmatpush1.msra.mxu0 0.0
    %503 = vmatprep.subr.mxu0 0.0
    %504 = vmatpush1.msra.mxu0 0.0
    %505 = vmatprep.subr.mxu0 0.0
    %506 = vmatpush1.msra.mxu0 0.0
    %507 = vmatprep.subr.mxu0 0.0
    %508 = vmatpush1.msra.mxu0 0.0
    %509 = vmatprep.subr.mxu0 0.0
    %510 = vmatpush1.msra.mxu0 0.0
    %511 = vmatprep.subr.mxu0 0.0
    %512 = vmatpush1.msra.mxu0 0.0
    %513 = vmatprep.mubr.f32.mxu0 0.0
    %514 = vmatmul.mubr.f32.gmra.mrb[0].mxu0 %v447
    %v515 = vpop.f32.mrb[0].mxu0
    %v516 = vadd.f32 %v209, %v515
    %v517 = vpop.f32.mrb[0].mxu0
    %518 = vdwg.mxu0
    %v519 = vtanh.pop %v516
    %v520 = vsel %vm185, %v519, %v364
    %v522 = vsel %vm211, %v440, 0
    %524 = vmatprep.subr.mxu0 0.0
    %525 = vmatpush1.msra.mxu0 %v192
    %526 = vmatprep.subr.mxu0 0.0
    %527 = vmatpush1.msra.mxu0 %v193
    %528 = vmatprep.subr.mxu0 0.0
    %529 = vmatpush1.msra.mxu0 %v194
    %530 = vmatprep.subr.mxu0 0.0
    %531 = vmatpush1.msra.mxu0 %v195
    %532 = vmatprep.subr.mxu0 0.0
    %533 = vmatpush1.msra.mxu0 0.0
    %534 = vmatprep.subr.mxu0 0.0
    %535 = vmatpush1.msra.mxu0 0.0
    %536 = vmatprep.subr.mxu0 0.0
    %537 = vmatpush1.msra.mxu0 0.0
    %538 = vmatprep.subr.mxu0 0.0
    %539 = vmatpush1.msra.mxu0 0.0
    %540 = vmatprep.subr.mxu0 0.0
    %541 = vmatpush1.msra.mxu0 0.0
    %542 = vmatprep.subr.mxu0 0.0
    %543 = vmatpush1.msra.mxu0 0.0
    %544 = vmatprep.subr.mxu0 0.0
    %545 = vmatpush1.msra.mxu0 0.0
    %546 = vmatprep.subr.mxu0 0.0
    %547 = vmatpush1.msra.mxu0 0.0
    %548 = vmatprep.subr.mxu0 0.0
    %549 = vmatpush1.msra.mxu0 0.0
    %550 = vmatprep.subr.mxu0 0.0
    %551 = vmatpush1.msra.mxu0 0.0
    %552 = vmatprep.subr.mxu0 0.0
    %553 = vmatpush1.msra.mxu0 0.0
    %554 = vmatprep.subr.mxu0 0.0
    %555 = vmatpush1.msra.mxu0 0.0
    %556 = vmatprep.subr.mxu0 0.0
    %557 = vmatpush1.msra.mxu0 0.0
    %558 = vmatprep.subr.mxu0 0.0
    %559 = vmatpush1.msra.mxu0 0.0
    %560 = vmatprep.subr.mxu0 0.0
    %561 = vmatpush1.msra.mxu0 0.0
    %562 = vmatprep.subr.mxu0 0.0
    %563 = vmatpush1.msra.mxu0 0.0
    %564 = vmatprep.subr.mxu0 0.0
    %565 = vmatpush1.msra.mxu0 0.0
    %566 = vmatprep.subr.mxu0 0.0
    %567 = vmatpush1.msra.mxu0 0.0
    %568 = vmatprep.subr.mxu0 0.0
    %569 = vmatpush1.msra.mxu0 0.0
    %570 = vmatprep.subr.mxu0 0.0
    %571 = vmatpush1.msra.mxu0 0.0
    %572 = vmatprep.subr.mxu0 0.0
    %573 = vmatpush1.msra.mxu0 0.0
    %574 = vmatprep.subr.mxu0 0.0
    %575 = vmatpush1.msra.mxu0 0.0
    %576 = vmatprep.subr.mxu0 0.0
    %577 = vmatpush1.msra.mxu0 0.0
    %578 = vmatprep.subr.mxu0 0.0
    %579 = vmatpush1.msra.mxu0 0.0
    %580 = vmatprep.subr.mxu0 0.0
    %581 = vmatpush1.msra.mxu0 0.0
    %582 = vmatprep.subr.mxu0 0.0
    %583 = vmatpush1.msra.mxu0 0.0
    %584 = vmatprep.subr.mxu0 0.0
    %585 = vmatpush1.msra.mxu0 0.0
    %586 = vmatprep.subr.mxu0 0.0
    %587 = vmatpush1.msra.mxu0 0.0
    %588 = vmatprep.mubr.f32.mxu0 0.0
    %589 = vmatmul.mubr.f32.gmra.mrb[0].mxu0 %v522
    %v590 = vpop.f32.mrb[0].mxu0
    %v591 = vadd.f32 0.0, %v590
    %v592 = vpop.f32.mrb[0].mxu0
    %593 = vdwg.mxu0
    %v594 = vadd.f32 %v152, %v591
    %v595 = vtanh.pop %v594
    %v596 = vsel %vm186, %v595, %v440
    %598 = vrot.lane.b32.xlu0 %v520, 32
    %v599 = vpop.permute.xlu0 %598
    %v601 = vsel %vm211, %v596, %v599
    %v603 = vsel %vm289, %v601, 0
    %605 = vmatprep.subr.mxu0 0.0
    %606 = vmatpush1.msra.mxu0 %v196
    %607 = vmatprep.subr.mxu0 0.0
    %608 = vmatpush1.msra.mxu0 %v197
    %609 = vmatprep.subr.mxu0 0.0
    %610 = vmatpush1.msra.mxu0 %v198
    %611 = vmatprep.subr.mxu0 0.0
    %612 = vmatpush1.msra.mxu0 %v199
    %613 = vmatprep.subr.mxu0 0.0
    %614 = vmatpush1.msra.mxu0 %v200
    %615 = vmatprep.subr.mxu0 0.0
    %616 = vmatpush1.msra.mxu0 %v201
    %617 = vmatprep.subr.mxu0 0.0
    %618 = vmatpush1.msra.mxu0 %v202
    %619 = vmatprep.subr.mxu0 0.0
    %620 = vmatpush1.msra.mxu0 %v203
    %621 = vmatprep.subr.mxu0 0.0
    %622 = vmatpush1.msra.mxu0 0.0
    %623 = vmatprep.subr.mxu0 0.0
    %624 = vmatpush1.msra.mxu0 0.0
    %625 = vmatprep.subr.mxu0 0.0
    %626 = vmatpush1.msra.mxu0 0.0
    %627 = vmatprep.subr.mxu0 0.0
    %628 = vmatpush1.msra.mxu0 0.0
    %629 = vmatprep.subr.mxu0 0.0
    %630 = vmatpush1.msra.mxu0 0.0
    %631 = vmatprep.subr.mxu0 0.0
    %632 = vmatpush1.msra.mxu0 0.0
    %633 = vmatprep.subr.mxu0 0.0
    %634 = vmatpush1.msra.mxu0 0.0
    %635 = vmatprep.subr.mxu0 0.0
    %636 = vmatpush1.msra.mxu0 0.0
    %637 = vmatprep.subr.mxu0 0.0
    %638 = vmatpush1.msra.mxu0 0.0
    %639 = vmatprep.subr.mxu0 0.0
    %640 = vmatpush1.msra.mxu0 0.0
    %641 = vmatprep.subr.mxu0 0.0
    %642 = vmatpush1.msra.mxu0 0.0
    %643 = vmatprep.subr.mxu0 0.0
    %644 = vmatpush1.msra.mxu0 0.0
    %645 = vmatprep.subr.mxu0 0.0
    %646 = vmatpush1.msra.mxu0 0.0
    %647 = vmatprep.subr.mxu0 0.0
    %648 = vmatpush1.msra.mxu0 0.0
    %649 = vmatprep.subr.mxu0 0.0
    %650 = vmatpush1.msra.mxu0 0.0
    %651 = vmatprep.subr.mxu0 0.0
    %652 = vmatpush1.msra.mxu0 0.0
    %653 = vmatprep.subr.mxu0 0.0
    %654 = vmatpush1.msra.mxu0 0.0
    %655 = vmatprep.subr.mxu0 0.0
    %656 = vmatpush1.msra.mxu0 0.0
    %657 = vmatprep.subr.mxu0 0.0
    %658 = vmatpush1.msra.mxu0 0.0
    %659 = vmatprep.subr.mxu0 0.0
    %660 = vmatpush1.msra.mxu0 0.0
    %661 = vmatprep.subr.mxu0 0.0
    %662 = vmatpush1.msra.mxu0 0.0
    %663 = vmatprep.subr.mxu0 0.0
    %664 = vmatpush1.msra.mxu0 0.0
    %665 = vmatprep.subr.mxu0 0.0
    %666 = vmatpush1.msra.mxu0 0.0
    %667 = vmatprep.subr.mxu0 0.0
    %668 = vmatpush1.msra.mxu0 0.0
    %669 = vmatprep.mubr.f32.mxu0 0.0
    %670 = vmatmul.mubr.f32.gmra.mrb[0].mxu0 %v603
    %v671 = vpop.f32.mrb[0].mxu0
    %v672 = vadd.f32 %v209, %v671
    %v673 = vpop.f32.mrb[0].mxu0
    %674 = vdwg.mxu0
    %v675 = vtanh.pop %v672
    %v676 = vsel %vm186, %v675, %v520
    %v678 = vsel %vm211, %v596, 0
    %680 = vmatprep.subr.mxu0 0.0
    %681 = vmatpush1.msra.mxu0 %v192
    %682 = vmatprep.subr.mxu0 0.0
    %683 = vmatpush1.msra.mxu0 %v193
    %684 = vmatprep.subr.mxu0 0.0
    %685 = vmatpush1.msra.mxu0 %v194
    %686 = vmatprep.subr.mxu0 0.0
    %687 = vmatpush1.msra.mxu0 %v195
    %688 = vmatprep.subr.mxu0 0.0
    %689 = vmatpush1.msra.mxu0 0.0
    %690 = vmatprep.subr.mxu0 0.0
    %691 = vmatpush1.msra.mxu0 0.0
    %692 = vmatprep.subr.mxu0 0.0
    %693 = vmatpush1.msra.mxu0 0.0
    %694 = vmatprep.subr.mxu0 0.0
    %695 = vmatpush1.msra.mxu0 0.0
    %696 = vmatprep.subr.mxu0 0.0
    %697 = vmatpush1.msra.mxu0 0.0
    %698 = vmatprep.subr.mxu0 0.0
    %699 = vmatpush1.msra.mxu0 0.0
    %700 = vmatprep.subr.mxu0 0.0
    %701 = vmatpush1.msra.mxu0 0.0
    %702 = vmatprep.subr.mxu0 0.0
    %703 = vmatpush1.msra.mxu0 0.0
    %704 = vmatprep.subr.mxu0 0.0
    %705 = vmatpush1.msra.mxu0 0.0
    %706 = vmatprep.subr.mxu0 0.0
    %707 = vmatpush1.msra.mxu0 0.0
    %708 = vmatprep.subr.mxu0 0.0
    %709 = vmatpush1.msra.mxu0 0.0
    %710 = vmatprep.subr.mxu0 0.0
    %711 = vmatpush1.msra.mxu0 0.0
    %712 = vmatprep.subr.mxu0 0.0
    %713 = vmatpush1.msra.mxu0 0.0
    %714 = vmatprep.subr.mxu0 0.0
    %715 = vmatpush1.msra.mxu0 0.0
    %716 = vmatprep.subr.mxu0 0.0
    %717 = vmatpush1.msra.mxu0 0.0
    %718 = vmatprep.subr.mxu0 0.0
    %719 = vmatpush1.msra.mxu0 0.0
    %720 = vmatprep.subr.mxu0 0.0
    %721 = vmatpush1.msra.mxu0 0.0
    %722 = vmatprep.subr.mxu0 0.0
    %723 = vmatpush1.msra.mxu0 0.0
    %724 = vmatprep.subr.mxu0 0.0
    %725 = vmatpush1.msra.mxu0 0.0
    %726 = vmatprep.subr.mxu0 0.0
    %727 = vmatpush1.msra.mxu0 0.0
    %728 = vmatprep.subr.mxu0 0.0
    %729 = vmatpush1.msra.mxu0 0.0
    %730 = vmatprep.subr.mxu0 0.0
    %731 = vmatpush1.msra.mxu0 0.0
    %732 = vmatprep.subr.mxu0 0.0
    %733 = vmatpush1.msra.mxu0 0.0
    %734 = vmatprep.subr.mxu0 0.0
    %735 = vmatpush1.msra.mxu0 0.0
    %736 = vmatprep.subr.mxu0 0.0
    %737 = vmatpush1.msra.mxu0 0.0
    %738 = vmatprep.subr.mxu0 0.0
    %739 = vmatpush1.msra.mxu0 0.0
    %740 = vmatprep.subr.mxu0 0.0
    %741 = vmatpush1.msra.mxu0 0.0
    %742 = vmatprep.subr.mxu0 0.0
    %743 = vmatpush1.msra.mxu0 0.0
    %744 = vmatprep.mubr.f32.mxu0 0.0
    %745 = vmatmul.mubr.f32.gmra.mrb[0].mxu0 %v678
    %v746 = vpop.f32.mrb[0].mxu0
    %v747 = vadd.f32 0.0, %v746
    %v748 = vpop.f32.mrb[0].mxu0
    %749 = vdwg.mxu0
    %v750 = vadd.f32 %v157, %v747
    %v751 = vtanh.pop %v750
    %v752 = vsel %vm187, %v751, %v596
    %754 = vrot.lane.b32.xlu0 %v676, 32
    %v755 = vpop.permute.xlu0 %754
    %v757 = vsel %vm211, %v752, %v755
    %v759 = vsel %vm289, %v757, 0
    %761 = vmatprep.subr.mxu0 0.0
    %762 = vmatpush1.msra.mxu0 %v196
    %763 = vmatprep.subr.mxu0 0.0
    %764 = vmatpush1.msra.mxu0 %v197
    %765 = vmatprep.subr.mxu0 0.0
    %766 = vmatpush1.msra.mxu0 %v198
    %767 = vmatprep.subr.mxu0 0.0
    %768 = vmatpush1.msra.mxu0 %v199
    %769 = vmatprep.subr.mxu0 0.0
    %770 = vmatpush1.msra.mxu0 %v200
    %771 = vmatprep.subr.mxu0 0.0
    %772 = vmatpush1.msra.mxu0 %v201
    %773 = vmatprep.subr.mxu0 0.0
    %774 = vmatpush1.msra.mxu0 %v202
    %775 = vmatprep.subr.mxu0 0.0
    %776 = vmatpush1.msra.mxu0 %v203
    %777 = vmatprep.subr.mxu0 0.0
    %778 = vmatpush1.msra.mxu0 0.0
    %779 = vmatprep.subr.mxu0 0.0
    %780 = vmatpush1.msra.mxu0 0.0
    %781 = vmatprep.subr.mxu0 0.0
    %782 = vmatpush1.msra.mxu0 0.0
    %783 = vmatprep.subr.mxu0 0.0
    %784 = vmatpush1.msra.mxu0 0.0
    %785 = vmatprep.subr.mxu0 0.0
    %786 = vmatpush1.msra.mxu0 0.0
    %787 = vmatprep.subr.mxu0 0.0
    %788 = vmatpush1.msra.mxu0 0.0
    %789 = vmatprep.subr.mxu0 0.0
    %790 = vmatpush1.msra.mxu0 0.0
    %791 = vmatprep.subr.mxu0 0.0
    %792 = vmatpush1.msra.mxu0 0.0
    %793 = vmatprep.subr.mxu0 0.0
    %794 = vmatpush1.msra.mxu0 0.0
    %795 = vmatprep.subr.mxu0 0.0
    %796 = vmatpush1.msra.mxu0 0.0
    %797 = vmatprep.subr.mxu0 0.0
    %798 = vmatpush1.msra.mxu0 0.0
    %799 = vmatprep.subr.mxu0 0.0
    %800 = vmatpush1.msra.mxu0 0.0
    %801 = vmatprep.subr.mxu0 0.0
    %802 = vmatpush1.msra.mxu0 0.0
    %803 = vmatprep.subr.mxu0 0.0
    %804 = vmatpush1.msra.mxu0 0.0
    %805 = vmatprep.subr.mxu0 0.0
    %806 = vmatpush1.msra.mxu0 0.0
    %807 = vmatprep.subr.mxu0 0.0
    %808 = vmatpush1.msra.mxu0 0.0
    %809 = vmatprep.subr.mxu0 0.0
    %810 = vmatpush1.msra.mxu0 0.0
    %811 = vmatprep.subr.mxu0 0.0
    %812 = vmatpush1.msra.mxu0 0.0
    %813 = vmatprep.subr.mxu0 0.0
    %814 = vmatpush1.msra.mxu0 0.0
    %815 = vmatprep.subr.mxu0 0.0
    %816 = vmatpush1.msra.mxu0 0.0
    %817 = vmatprep.subr.mxu0 0.0
    %818 = vmatpush1.msra.mxu0 0.0
    %819 = vmatprep.subr.mxu0 0.0
    %820 = vmatpush1.msra.mxu0 0.0
    %821 = vmatprep.subr.mxu0 0.0
    %822 = vmatpush1.msra.mxu0 0.0
    %823 = vmatprep.subr.mxu0 0.0
    %824 = vmatpush1.msra.mxu0 0.0
    %825 = vmatprep.mubr.f32.mxu0 0.0
    %826 = vmatmul.mubr.f32.gmra.mrb[0].mxu0 %v759
    %v827 = vpop.f32.mrb[0].mxu0
    %v828 = vadd.f32 %v209, %v827
    %v829 = vpop.f32.mrb[0].mxu0
    %830 = vdwg.mxu0
    %v831 = vtanh.pop %v828
    %v832 = vsel %vm187, %v831, %v676
    %v834 = vsel %vm211, %v752, 0
    %836 = vmatprep.subr.mxu0 0.0
    %837 = vmatpush1.msra.mxu0 %v192
    %838 = vmatprep.subr.mxu0 0.0
    %839 = vmatpush1.msra.mxu0 %v193
    %840 = vmatprep.subr.mxu0 0.0
    %841 = vmatpush1.msra.mxu0 %v194
    %842 = vmatprep.subr.mxu0 0.0
    %843 = vmatpush1.msra.mxu0 %v195
    %844 = vmatprep.subr.mxu0 0.0
    %845 = vmatpush1.msra.mxu0 0.0
    %846 = vmatprep.subr.mxu0 0.0
    %847 = vmatpush1.msra.mxu0 0.0
    %848 = vmatprep.subr.mxu0 0.0
    %849 = vmatpush1.msra.mxu0 0.0
    %850 = vmatprep.subr.mxu0 0.0
    %851 = vmatpush1.msra.mxu0 0.0
    %852 = vmatprep.subr.mxu0 0.0
    %853 = vmatpush1.msra.mxu0 0.0
    %854 = vmatprep.subr.mxu0 0.0
    %855 = vmatpush1.msra.mxu0 0.0
    %856 = vmatprep.subr.mxu0 0.0
    %857 = vmatpush1.msra.mxu0 0.0
    %858 = vmatprep.subr.mxu0 0.0
    %859 = vmatpush1.msra.mxu0 0.0
    %860 = vmatprep.subr.mxu0 0.0
    %861 = vmatpush1.msra.mxu0 0.0
    %862 = vmatprep.subr.mxu0 0.0
    %863 = vmatpush1.msra.mxu0 0.0
    %864 = vmatprep.subr.mxu0 0.0
    %865 = vmatpush1.msra.mxu0 0.0
    %866 = vmatprep.subr.mxu0 0.0
    %867 = vmatpush1.msra.mxu0 0.0
    %868 = vmatprep.subr.mxu0 0.0
    %869 = vmatpush1.msra.mxu0 0.0
    %870 = vmatprep.subr.mxu0 0.0
    %871 = vmatpush1.msra.mxu0 0.0
    %872 = vmatprep.subr.mxu0 0.0
    %873 = vmatpush1.msra.mxu0 0.0
    %874 = vmatprep.subr.mxu0 0.0
    %875 = vmatpush1.msra.mxu0 0.0
    %876 = vmatprep.subr.mxu0 0.0
    %877 = vmatpush1.msra.mxu0 0.0
    %878 = vmatprep.subr.mxu0 0.0
    %879 = vmatpush1.msra.mxu0 0.0
    %880 = vmatprep.subr.mxu0 0.0
    %881 = vmatpush1.msra.mxu0 0.0
    %882 = vmatprep.subr.mxu0 0.0
    %883 = vmatpush1.msra.mxu0 0.0
    %884 = vmatprep.subr.mxu0 0.0
    %885 = vmatpush1.msra.mxu0 0.0
    %886 = vmatprep.subr.mxu0 0.0
    %887 = vmatpush1.msra.mxu0 0.0
    %888 = vmatprep.subr.mxu0 0.0
    %889 = vmatpush1.msra.mxu0 0.0
    %890 = vmatprep.subr.mxu0 0.0
    %891 = vmatpush1.msra.mxu0 0.0
    %892 = vmatprep.subr.mxu0 0.0
    %893 = vmatpush1.msra.mxu0 0.0
    %894 = vmatprep.subr.mxu0 0.0
    %895 = vmatpush1.msra.mxu0 0.0
    %896 = vmatprep.subr.mxu0 0.0
    %897 = vmatpush1.msra.mxu0 0.0
    %898 = vmatprep.subr.mxu0 0.0
    %899 = vmatpush1.msra.mxu0 0.0
    %900 = vmatprep.mubr.f32.mxu0 0.0
    %901 = vmatmul.mubr.f32.gmra.mrb[0].mxu0 %v834
    %v902 = vpop.f32.mrb[0].mxu0
    %v903 = vadd.f32 0.0, %v902
    %v904 = vpop.f32.mrb[0].mxu0
    %905 = vdwg.mxu0
    %v906 = vadd.f32 %v162, %v903
    %v907 = vtanh.pop %v906
    %v908 = vsel %vm188, %v907, %v752
    %910 = vrot.lane.b32.xlu0 %v832, 32
    %v911 = vpop.permute.xlu0 %910
    %v913 = vsel %vm211, %v908, %v911
    %v915 = vsel %vm289, %v913, 0
    %917 = vmatprep.subr.mxu0 0.0
    %918 = vmatpush1.msra.mxu0 %v196
    %919 = vmatprep.subr.mxu0 0.0
    %920 = vmatpush1.msra.mxu0 %v197
    %921 = vmatprep.subr.mxu0 0.0
    %922 = vmatpush1.msra.mxu0 %v198
    %923 = vmatprep.subr.mxu0 0.0
    %924 = vmatpush1.msra.mxu0 %v199
    %925 = vmatprep.subr.mxu0 0.0
    %926 = vmatpush1.msra.mxu0 %v200
    %927 = vmatprep.subr.mxu0 0.0
    %928 = vmatpush1.msra.mxu0 %v201
    %929 = vmatprep.subr.mxu0 0.0
    %930 = vmatpush1.msra.mxu0 %v202
    %931 = vmatprep.subr.mxu0 0.0
    %932 = vmatpush1.msra.mxu0 %v203
    %933 = vmatprep.subr.mxu0 0.0
    %934 = vmatpush1.msra.mxu0 0.0
    %935 = vmatprep.subr.mxu0 0.0
    %936 = vmatpush1.msra.mxu0 0.0
    %937 = vmatprep.subr.mxu0 0.0
    %938 = vmatpush1.msra.mxu0 0.0
    %939 = vmatprep.subr.mxu0 0.0
    %940 = vmatpush1.msra.mxu0 0.0
    %941 = vmatprep.subr.mxu0 0.0
    %942 = vmatpush1.msra.mxu0 0.0
    %943 = vmatprep.subr.mxu0 0.0
    %944 = vmatpush1.msra.mxu0 0.0
    %945 = vmatprep.subr.mxu0 0.0
    %946 = vmatpush1.msra.mxu0 0.0
    %947 = vmatprep.subr.mxu0 0.0
    %948 = vmatpush1.msra.mxu0 0.0
    %949 = vmatprep.subr.mxu0 0.0
    %950 = vmatpush1.msra.mxu0 0.0
    %951 = vmatprep.subr.mxu0 0.0
    %952 = vmatpush1.msra.mxu0 0.0
    %953 = vmatprep.subr.mxu0 0.0
    %954 = vmatpush1.msra.mxu0 0.0
    %955 = vmatprep.subr.mxu0 0.0
    %956 = vmatpush1.msra.mxu0 0.0
    %957 = vmatprep.subr.mxu0 0.0
    %958 = vmatpush1.msra.mxu0 0.0
    %959 = vmatprep.subr.mxu0 0.0
    %960 = vmatpush1.msra.mxu0 0.0
    %961 = vmatprep.subr.mxu0 0.0
    %962 = vmatpush1.msra.mxu0 0.0
    %963 = vmatprep.subr.mxu0 0.0
    %964 = vmatpush1.msra.mxu0 0.0
    %965 = vmatprep.subr.mxu0 0.0
    %966 = vmatpush1.msra.mxu0 0.0
    %967 = vmatprep.subr.mxu0 0.0
    %968 = vmatpush1.msra.mxu0 0.0
    %969 = vmatprep.subr.mxu0 0.0
    %970 = vmatpush1.msra.mxu0 0.0
    %971 = vmatprep.subr.mxu0 0.0
    %972 = vmatpush1.msra.mxu0 0.0
    %973 = vmatprep.subr.mxu0 0.0
    %974 = vmatpush1.msra.mxu0 0.0
    %975 = vmatprep.subr.mxu0 0.0
    %976 = vmatpush1.msra.mxu0 0.0
    %977 = vmatprep.subr.mxu0 0.0
    %978 = vmatpush1.msra.mxu0 0.0
    %979 = vmatprep.subr.mxu0 0.0
    %980 = vmatpush1.msra.mxu0 0.0
    %981 = vmatprep.mubr.f32.mxu0 0.0
    %982 = vmatmul.mubr.f32.gmra.mrb[0].mxu0 %v915
    %v983 = vpop.f32.mrb[0].mxu0
    %v984 = vadd.f32 %v209, %v983
    %v985 = vpop.f32.mrb[0].mxu0
    %986 = vdwg.mxu0
    %v987 = vtanh.pop %v984
    %v988 = vsel %vm188, %v987, %v832
    %v990 = vsel %vm211, %v908, 0
    %992 = vmatprep.subr.mxu0 0.0
    %993 = vmatpush1.msra.mxu0 %v192
    %994 = vmatprep.subr.mxu0 0.0
    %995 = vmatpush1.msra.mxu0 %v193
    %996 = vmatprep.subr.mxu0 0.0
    %997 = vmatpush1.msra.mxu0 %v194
    %998 = vmatprep.subr.mxu0 0.0
    %999 = vmatpush1.msra.mxu0 %v195
    %1000 = vmatprep.subr.mxu0 0.0
    %1001 = vmatpush1.msra.mxu0 0.0
    %1002 = vmatprep.subr.mxu0 0.0
    %1003 = vmatpush1.msra.mxu0 0.0
    %1004 = vmatprep.subr.mxu0 0.0
    %1005 = vmatpush1.msra.mxu0 0.0
    %1006 = vmatprep.subr.mxu0 0.0
    %1007 = vmatpush1.msra.mxu0 0.0
    %1008 = vmatprep.subr.mxu0 0.0
    %1009 = vmatpush1.msra.mxu0 0.0
    %1010 = vmatprep.subr.mxu0 0.0
    %1011 = vmatpush1.msra.mxu0 0.0
    %1012 = vmatprep.subr.mxu0 0.0
    %1013 = vmatpush1.msra.mxu0 0.0
    %1014 = vmatprep.subr.mxu0 0.0
    %1015 = vmatpush1.msra.mxu0 0.0
    %1016 = vmatprep.subr.mxu0 0.0
    %1017 = vmatpush1.msra.mxu0 0.0
    %1018 = vmatprep.subr.mxu0 0.0
    %1019 = vmatpush1.msra.mxu0 0.0
    %1020 = vmatprep.subr.mxu0 0.0
    %1021 = vmatpush1.msra.mxu0 0.0
    %1022 = vmatprep.subr.mxu0 0.0
    %1023 = vmatpush1.msra.mxu0 0.0
    %1024 = vmatprep.subr.mxu0 0.0
    %1025 = vmatpush1.msra.mxu0 0.0
    %1026 = vmatprep.subr.mxu0 0.0
    %1027 = vmatpush1.msra.mxu0 0.0
    %1028 = vmatprep.subr.mxu0 0.0
    %1029 = vmatpush1.msra.mxu0 0.0
    %1030 = vmatprep.subr.mxu0 0.0
    %1031 = vmatpush1.msra.mxu0 0.0
    %1032 = vmatprep.subr.mxu0 0.0
    %1033 = vmatpush1.msra.mxu0 0.0
    %1034 = vmatprep.subr.mxu0 0.0
    %1035 = vmatpush1.msra.mxu0 0.0
    %1036 = vmatprep.subr.mxu0 0.0
    %1037 = vmatpush1.msra.mxu0 0.0
    %1038 = vmatprep.subr.mxu0 0.0
    %1039 = vmatpush1.msra.mxu0 0.0
    %1040 = vmatprep.subr.mxu0 0.0
    %1041 = vmatpush1.msra.mxu0 0.0
    %1042 = vmatprep.subr.mxu0 0.0
    %1043 = vmatpush1.msra.mxu0 0.0
    %1044 = vmatprep.subr.mxu0 0.0
    %1045 = vmatpush1.msra.mxu0 0.0
    %1046 = vmatprep.subr.mxu0 0.0
    %1047 = vmatpush1.msra.mxu0 0.0
    %1048 = vmatprep.subr.mxu0 0.0
    %1049 = vmatpush1.msra.mxu0 0.0
    %1050 = vmatprep.subr.mxu0 0.0
    %1051 = vmatpush1.msra.mxu0 0.0
    %1052 = vmatprep.subr.mxu0 0.0
    %1053 = vmatpush1.msra.mxu0 0.0
    %1054 = vmatprep.subr.mxu0 0.0
    %1055 = vmatpush1.msra.mxu0 0.0
    %1056 = vmatprep.mubr.f32.mxu0 0.0
    %1057 = vmatmul.mubr.f32.gmra.mrb[0].mxu0 %v990
    %v1058 = vpop.f32.mrb[0].mxu0
    %v1059 = vadd.f32 0.0, %v1058
    %v1060 = vpop.f32.mrb[0].mxu0
    %1061 = vdwg.mxu0
    %v1062 = vadd.f32 %v167, %v1059
    %v1063 = vtanh.pop %v1062
    %v1064 = vsel %vm189, %v1063, %v908
    %1066 = vrot.lane.b32.xlu0 %v988, 32
    %v1067 = vpop.permute.xlu0 %1066
    %v1069 = vsel %vm211, %v1064, %v1067
    %v1071 = vsel %vm289, %v1069, 0
    %1073 = vmatprep.subr.mxu0 0.0
    %1074 = vmatpush1.msra.mxu0 %v196
    %1075 = vmatprep.subr.mxu0 0.0
    %1076 = vmatpush1.msra.mxu0 %v197
    %1077 = vmatprep.subr.mxu0 0.0
    %1078 = vmatpush1.msra.mxu0 %v198
    %1079 = vmatprep.subr.mxu0 0.0
    %1080 = vmatpush1.msra.mxu0 %v199
    %1081 = vmatprep.subr.mxu0 0.0
    %1082 = vmatpush1.msra.mxu0 %v200
    %1083 = vmatprep.subr.mxu0 0.0
    %1084 = vmatpush1.msra.mxu0 %v201
    %1085 = vmatprep.subr.mxu0 0.0
    %1086 = vmatpush1.msra.mxu0 %v202
    %1087 = vmatprep.subr.mxu0 0.0
    %1088 = vmatpush1.msra.mxu0 %v203
    %1089 = vmatprep.subr.mxu0 0.0
    %1090 = vmatpush1.msra.mxu0 0.0
    %1091 = vmatprep.subr.mxu0 0.0
    %1092 = vmatpush1.msra.mxu0 0.0
    %1093 = vmatprep.subr.mxu0 0.0
    %1094 = vmatpush1.msra.mxu0 0.0
    %1095 = vmatprep.subr.mxu0 0.0
    %1096 = vmatpush1.msra.mxu0 0.0
    %1097 = vmatprep.subr.mxu0 0.0
    %1098 = vmatpush1.msra.mxu0 0.0
    %1099 = vmatprep.subr.mxu0 0.0
    %1100 = vmatpush1.msra.mxu0 0.0
    %1101 = vmatprep.subr.mxu0 0.0
    %1102 = vmatpush1.msra.mxu0 0.0
    %1103 = vmatprep.subr.mxu0 0.0
    %1104 = vmatpush1.msra.mxu0 0.0
    %1105 = vmatprep.subr.mxu0 0.0
    %1106 = vmatpush1.msra.mxu0 0.0
    %1107 = vmatprep.subr.mxu0 0.0
    %1108 = vmatpush1.msra.mxu0 0.0
    %1109 = vmatprep.subr.mxu0 0.0
    %1110 = vmatpush1.msra.mxu0 0.0
    %1111 = vmatprep.subr.mxu0 0.0
    %1112 = vmatpush1.msra.mxu0 0.0
    %1113 = vmatprep.subr.mxu0 0.0
    %1114 = vmatpush1.msra.mxu0 0.0
    %1115 = vmatprep.subr.mxu0 0.0
    %1116 = vmatpush1.msra.mxu0 0.0
    %1117 = vmatprep.subr.mxu0 0.0
    %1118 = vmatpush1.msra.mxu0 0.0
    %1119 = vmatprep.subr.mxu0 0.0
    %1120 = vmatpush1.msra.mxu0 0.0
    %1121 = vmatprep.subr.mxu0 0.0
    %1122 = vmatpush1.msra.mxu0 0.0
    %1123 = vmatprep.subr.mxu0 0.0
    %1124 = vmatpush1.msra.mxu0 0.0
    %1125 = vmatprep.subr.mxu0 0.0
    %1126 = vmatpush1.msra.mxu0 0.0
    %1127 = vmatprep.subr.mxu0 0.0
    %1128 = vmatpush1.msra.mxu0 0.0
    %1129 = vmatprep.subr.mxu0 0.0
    %1130 = vmatpush1.msra.mxu0 0.0
    %1131 = vmatprep.subr.mxu0 0.0
    %1132 = vmatpush1.msra.mxu0 0.0
    %1133 = vmatprep.subr.mxu0 0.0
    %1134 = vmatpush1.msra.mxu0 0.0
    %1135 = vmatprep.subr.mxu0 0.0
    %1136 = vmatpush1.msra.mxu0 0.0
    %1137 = vmatprep.mubr.f32.mxu0 0.0
    %1138 = vmatmul.mubr.f32.gmra.mrb[0].mxu0 %v1071
    %v1139 = vpop.f32.mrb[0].mxu0
    %v1140 = vadd.f32 %v209, %v1139
    %v1141 = vpop.f32.mrb[0].mxu0
    %1142 = vdwg.mxu0
    %v1143 = vtanh.pop %v1140
    %v1144 = vsel %vm189, %v1143, %v988
    %v1146 = vsel %vm211, %v1064, 0
    %1148 = vmatprep.subr.mxu0 0.0
    %1149 = vmatpush1.msra.mxu0 %v192
    %1150 = vmatprep.subr.mxu0 0.0
    %1151 = vmatpush1.msra.mxu0 %v193
    %1152 = vmatprep.subr.mxu0 0.0
    %1153 = vmatpush1.msra.mxu0 %v194
    %1154 = vmatprep.subr.mxu0 0.0
    %1155 = vmatpush1.msra.mxu0 %v195
    %1156 = vmatprep.subr.mxu0 0.0
    %1157 = vmatpush1.msra.mxu0 0.0
    %1158 = vmatprep.subr.mxu0 0.0
    %1159 = vmatpush1.msra.mxu0 0.0
    %1160 = vmatprep.subr.mxu0 0.0
    %1161 = vmatpush1.msra.mxu0 0.0
    %1162 = vmatprep.subr.mxu0 0.0
    %1163 = vmatpush1.msra.mxu0 0.0
    %1164 = vmatprep.subr.mxu0 0.0
    %1165 = vmatpush1.msra.mxu0 0.0
    %1166 = vmatprep.subr.mxu0 0.0
    %1167 = vmatpush1.msra.mxu0 0.0
    %1168 = vmatprep.subr.mxu0 0.0
    %1169 = vmatpush1.msra.mxu0 0.0
    %1170 = vmatprep.subr.mxu0 0.0
    %1171 = vmatpush1.msra.mxu0 0.0
    %1172 = vmatprep.subr.mxu0 0.0
    %1173 = vmatpush1.msra.mxu0 0.0
    %1174 = vmatprep.subr.mxu0 0.0
    %1175 = vmatpush1.msra.mxu0 0.0
    %1176 = vmatprep.subr.mxu0 0.0
    %1177 = vmatpush1.msra.mxu0 0.0
    %1178 = vmatprep.subr.mxu0 0.0
    %1179 = vmatpush1.msra.mxu0 0.0
    %1180 = vmatprep.subr.mxu0 0.0
    %1181 = vmatpush1.msra.mxu0 0.0
    %1182 = vmatprep.subr.mxu0 0.0
    %1183 = vmatpush1.msra.mxu0 0.0
    %1184 = vmatprep.subr.mxu0 0.0
    %1185 = vmatpush1.msra.mxu0 0.0
    %1186 = vmatprep.subr.mxu0 0.0
    %1187 = vmatpush1.msra.mxu0 0.0
    %1188 = vmatprep.subr.mxu0 0.0
    %1189 = vmatpush1.msra.mxu0 0.0
    %1190 = vmatprep.subr.mxu0 0.0
    %1191 = vmatpush1.msra.mxu0 0.0
    %1192 = vmatprep.subr.mxu0 0.0
    %1193 = vmatpush1.msra.mxu0 0.0
    %1194 = vmatprep.subr.mxu0 0.0
    %1195 = vmatpush1.msra.mxu0 0.0
    %1196 = vmatprep.subr.mxu0 0.0
    %1197 = vmatpush1.msra.mxu0 0.0
    %1198 = vmatprep.subr.mxu0 0.0
    %1199 = vmatpush1.msra.mxu0 0.0
    %1200 = vmatprep.subr.mxu0 0.0
    %1201 = vmatpush1.msra.mxu0 0.0
    %1202 = vmatprep.subr.mxu0 0.0
    %1203 = vmatpush1.msra.mxu0 0.0
    %1204 = vmatprep.subr.mxu0 0.0
    %1205 = vmatpush1.msra.mxu0 0.0
    %1206 = vmatprep.subr.mxu0 0.0
    %1207 = vmatpush1.msra.mxu0 0.0
    %1208 = vmatprep.subr.mxu0 0.0
    %1209 = vmatpush1.msra.mxu0 0.0
    %1210 = vmatprep.subr.mxu0 0.0
    %1211 = vmatpush1.msra.mxu0 0.0
    %1212 = vmatprep.mubr.f32.mxu0 0.0
    %1213 = vmatmul.mubr.f32.gmra.mrb[0].mxu0 %v1146
    %v1214 = vpop.f32.mrb[0].mxu0
    %v1215 = vadd.f32 0.0, %v1214
    %v1216 = vpop.f32.mrb[0].mxu0
    %1217 = vdwg.mxu0
    %v1218 = vadd.f32 %v172, %v1215
    %v1219 = vtanh.pop %v1218
    %v1220 = vsel %vm190, %v1219, %v1064
    %1222 = vrot.lane.b32.xlu0 %v1144, 32
    %v1223 = vpop.permute.xlu0 %1222
    %v1225 = vsel %vm211, %v1220, %v1223
    %v1227 = vsel %vm289, %v1225, 0
    %1229 = vmatprep.subr.mxu0 0.0
    %1230 = vmatpush1.msra.mxu0 %v196
    %1231 = vmatprep.subr.mxu0 0.0
    %1232 = vmatpush1.msra.mxu0 %v197
    %1233 = vmatprep.subr.mxu0 0.0
    %1234 = vmatpush1.msra.mxu0 %v198
    %1235 = vmatprep.subr.mxu0 0.0
    %1236 = vmatpush1.msra.mxu0 %v199
    %1237 = vmatprep.subr.mxu0 0.0
    %1238 = vmatpush1.msra.mxu0 %v200
    %1239 = vmatprep.subr.mxu0 0.0
    %1240 = vmatpush1.msra.mxu0 %v201
    %1241 = vmatprep.subr.mxu0 0.0
    %1242 = vmatpush1.msra.mxu0 %v202
    %1243 = vmatprep.subr.mxu0 0.0
    %1244 = vmatpush1.msra.mxu0 %v203
    %1245 = vmatprep.subr.mxu0 0.0
    %1246 = vmatpush1.msra.mxu0 0.0
    %1247 = vmatprep.subr.mxu0 0.0
    %1248 = vmatpush1.msra.mxu0 0.0
    %1249 = vmatprep.subr.mxu0 0.0
    %1250 = vmatpush1.msra.mxu0 0.0
    %1251 = vmatprep.subr.mxu0 0.0
    %1252 = vmatpush1.msra.mxu0 0.0
    %1253 = vmatprep.subr.mxu0 0.0
    %1254 = vmatpush1.msra.mxu0 0.0
    %1255 = vmatprep.subr.mxu0 0.0
    %1256 = vmatpush1.msra.mxu0 0.0
    %1257 = vmatprep.subr.mxu0 0.0
    %1258 = vmatpush1.msra.mxu0 0.0
    %1259 = vmatprep.subr.mxu0 0.0
    %1260 = vmatpush1.msra.mxu0 0.0
    %1261 = vmatprep.subr.mxu0 0.0
    %1262 = vmatpush1.msra.mxu0 0.0
    %1263 = vmatprep.subr.mxu0 0.0
    %1264 = vmatpush1.msra.mxu0 0.0
    %1265 = vmatprep.subr.mxu0 0.0
    %1266 = vmatpush1.msra.mxu0 0.0
    %1267 = vmatprep.subr.mxu0 0.0
    %1268 = vmatpush1.msra.mxu0 0.0
    %1269 = vmatprep.subr.mxu0 0.0
    %1270 = vmatpush1.msra.mxu0 0.0
    %1271 = vmatprep.subr.mxu0 0.0
    %1272 = vmatpush1.msra.mxu0 0.0
    %1273 = vmatprep.subr.mxu0 0.0
    %1274 = vmatpush1.msra.mxu0 0.0
    %1275 = vmatprep.subr.mxu0 0.0
    %1276 = vmatpush1.msra.mxu0 0.0
    %1277 = vmatprep.subr.mxu0 0.0
    %1278 = vmatpush1.msra.mxu0 0.0
    %1279 = vmatprep.subr.mxu0 0.0
    %1280 = vmatpush1.msra.mxu0 0.0
    %1281 = vmatprep.subr.mxu0 0.0
    %1282 = vmatpush1.msra.mxu0 0.0
    %1283 = vmatprep.subr.mxu0 0.0
    %1284 = vmatpush1.msra.mxu0 0.0
    %1285 = vmatprep.subr.mxu0 0.0
    %1286 = vmatpush1.msra.mxu0 0.0
    %1287 = vmatprep.subr.mxu0 0.0
    %1288 = vmatpush1.msra.mxu0 0.0
    %1289 = vmatprep.subr.mxu0 0.0
    %1290 = vmatpush1.msra.mxu0 0.0
    %1291 = vmatprep.subr.mxu0 0.0
    %1292 = vmatpush1.msra.mxu0 0.0
    %1293 = vmatprep.mubr.f32.mxu0 0.0
    %1294 = vmatmul.mubr.f32.gmra.mrb[0].mxu0 %v1227
    %v1295 = vpop.f32.mrb[0].mxu0
    %v1296 = vadd.f32 %v209, %v1295
    %v1297 = vpop.f32.mrb[0].mxu0
    %1298 = vdwg.mxu0
    %v1299 = vtanh.pop %v1296
    %v1300 = vsel %vm190, %v1299, %v1144
    %v1302 = vsel %vm211, %v1220, 0
    %1304 = vmatprep.subr.mxu0 0.0
    %1305 = vmatpush1.msra.mxu0 %v192
    %1306 = vmatprep.subr.mxu0 0.0
    %1307 = vmatpush1.msra.mxu0 %v193
    %1308 = vmatprep.subr.mxu0 0.0
    %1309 = vmatpush1.msra.mxu0 %v194
    %1310 = vmatprep.subr.mxu0 0.0
    %1311 = vmatpush1.msra.mxu0 %v195
    %1312 = vmatprep.subr.mxu0 0.0
    %1313 = vmatpush1.msra.mxu0 0.0
    %1314 = vmatprep.subr.mxu0 0.0
    %1315 = vmatpush1.msra.mxu0 0.0
    %1316 = vmatprep.subr.mxu0 0.0
    %1317 = vmatpush1.msra.mxu0 0.0
    %1318 = vmatprep.subr.mxu0 0.0
    %1319 = vmatpush1.msra.mxu0 0.0
    %1320 = vmatprep.subr.mxu0 0.0
    %1321 = vmatpush1.msra.mxu0 0.0
    %1322 = vmatprep.subr.mxu0 0.0
    %1323 = vmatpush1.msra.mxu0 0.0
    %1324 = vmatprep.subr.mxu0 0.0
    %1325 = vmatpush1.msra.mxu0 0.0
    %1326 = vmatprep.subr.mxu0 0.0
    %1327 = vmatpush1.msra.mxu0 0.0
    %1328 = vmatprep.subr.mxu0 0.0
    %1329 = vmatpush1.msra.mxu0 0.0
    %1330 = vmatprep.subr.mxu0 0.0
    %1331 = vmatpush1.msra.mxu0 0.0
    %1332 = vmatprep.subr.mxu0 0.0
    %1333 = vmatpush1.msra.mxu0 0.0
    %1334 = vmatprep.subr.mxu0 0.0
    %1335 = vmatpush1.msra.mxu0 0.0
    %1336 = vmatprep.subr.mxu0 0.0
    %1337 = vmatpush1.msra.mxu0 0.0
    %1338 = vmatprep.subr.mxu0 0.0
    %1339 = vmatpush1.msra.mxu0 0.0
    %1340 = vmatprep.subr.mxu0 0.0
    %1341 = vmatpush1.msra.mxu0 0.0
    %1342 = vmatprep.subr.mxu0 0.0
    %1343 = vmatpush1.msra.mxu0 0.0
    %1344 = vmatprep.subr.mxu0 0.0
    %1345 = vmatpush1.msra.mxu0 0.0
    %1346 = vmatprep.subr.mxu0 0.0
    %1347 = vmatpush1.msra.mxu0 0.0
    %1348 = vmatprep.subr.mxu0 0.0
    %1349 = vmatpush1.msra.mxu0 0.0
    %1350 = vmatprep.subr.mxu0 0.0
    %1351 = vmatpush1.msra.mxu0 0.0
    %1352 = vmatprep.subr.mxu0 0.0
    %1353 = vmatpush1.msra.mxu0 0.0
    %1354 = vmatprep.subr.mxu0 0.0
    %1355 = vmatpush1.msra.mxu0 0.0
    %1356 = vmatprep.subr.mxu0 0.0
    %1357 = vmatpush1.msra.mxu0 0.0
    %1358 = vmatprep.subr.mxu0 0.0
    %1359 = vmatpush1.msra.mxu0 0.0
    %1360 = vmatprep.subr.mxu0 0.0
    %1361 = vmatpush1.msra.mxu0 0.0
    %1362 = vmatprep.subr.mxu0 0.0
    %1363 = vmatpush1.msra.mxu0 0.0
    %1364 = vmatprep.subr.mxu0 0.0
    %1365 = vmatpush1.msra.mxu0 0.0
    %1366 = vmatprep.subr.mxu0 0.0
    %1367 = vmatpush1.msra.mxu0 0.0
    %1368 = vmatprep.mubr.f32.mxu0 0.0
    %1369 = vmatmul.mubr.f32.gmra.mrb[0].mxu0 %v1302
    %v1370 = vpop.f32.mrb[0].mxu0
    %v1371 = vadd.f32 0.0, %v1370
    %v1372 = vpop.f32.mrb[0].mxu0
    %1373 = vdwg.mxu0
    %v1374 = vadd.f32 %v177, %v1371
    %v1375 = vtanh.pop %v1374
    %v1376 = vsel %vm191, %v1375, %v1220
    %1378 = vrot.lane.b32.xlu0 %v1300, 32
    %v1379 = vpop.permute.xlu0 %1378
    %v1381 = vsel %vm211, %v1376, %v1379
    %v1383 = vsel %vm289, %v1381, 0
    %1385 = vmatprep.subr.mxu0 0.0
    %1386 = vmatpush1.msra.mxu0 %v196
    %1387 = vmatprep.subr.mxu0 0.0
    %1388 = vmatpush1.msra.mxu0 %v197
    %1389 = vmatprep.subr.mxu0 0.0
    %1390 = vmatpush1.msra.mxu0 %v198
    %1391 = vmatprep.subr.mxu0 0.0
    %1392 = vmatpush1.msra.mxu0 %v199
    %1393 = vmatprep.subr.mxu0 0.0
    %1394 = vmatpush1.msra.mxu0 %v200
    %1395 = vmatprep.subr.mxu0 0.0
    %1396 = vmatpush1.msra.mxu0 %v201
    %1397 = vmatprep.subr.mxu0 0.0
    %1398 = vmatpush1.msra.mxu0 %v202
    %1399 = vmatprep.subr.mxu0 0.0
    %1400 = vmatpush1.msra.mxu0 %v203
    %1401 = vmatprep.subr.mxu0 0.0
    %1402 = vmatpush1.msra.mxu0 0.0
    %1403 = vmatprep.subr.mxu0 0.0
    %1404 = vmatpush1.msra.mxu0 0.0
    %1405 = vmatprep.subr.mxu0 0.0
    %1406 = vmatpush1.msra.mxu0 0.0
    %1407 = vmatprep.subr.mxu0 0.0
    %1408 = vmatpush1.msra.mxu0 0.0
    %1409 = vmatprep.subr.mxu0 0.0
    %1410 = vmatpush1.msra.mxu0 0.0
    %1411 = vmatprep.subr.mxu0 0.0
    %1412 = vmatpush1.msra.mxu0 0.0
    %1413 = vmatprep.subr.mxu0 0.0
    %1414 = vmatpush1.msra.mxu0 0.0
    %1415 = vmatprep.subr.mxu0 0.0
    %1416 = vmatpush1.msra.mxu0 0.0
    %1417 = vmatprep.subr.mxu0 0.0
    %1418 = vmatpush1.msra.mxu0 0.0
    %1419 = vmatprep.subr.mxu0 0.0
    %1420 = vmatpush1.msra.mxu0 0.0
    %1421 = vmatprep.subr.mxu0 0.0
    %1422 = vmatpush1.msra.mxu0 0.0
    %1423 = vmatprep.subr.mxu0 0.0
    %1424 = vmatpush1.msra.mxu0 0.0
    %1425 = vmatprep.subr.mxu0 0.0
    %1426 = vmatpush1.msra.mxu0 0.0
    %1427 = vmatprep.subr.mxu0 0.0
    %1428 = vmatpush1.msra.mxu0 0.0
    %1429 = vmatprep.subr.mxu0 0.0
    %1430 = vmatpush1.msra.mxu0 0.0
    %1431 = vmatprep.subr.mxu0 0.0
    %1432 = vmatpush1.msra.mxu0 0.0
    %1433 = vmatprep.subr.mxu0 0.0
    %1434 = vmatpush1.msra.mxu0 0.0
    %1435 = vmatprep.subr.mxu0 0.0
    %1436 = vmatpush1.msra.mxu0 0.0
    %1437 = vmatprep.subr.mxu0 0.0
    %1438 = vmatpush1.msra.mxu0 0.0
    %1439 = vmatprep.subr.mxu0 0.0
    %1440 = vmatpush1.msra.mxu0 0.0
    %1441 = vmatprep.subr.mxu0 0.0
    %1442 = vmatpush1.msra.mxu0 0.0
    %1443 = vmatprep.subr.mxu0 0.0
    %1444 = vmatpush1.msra.mxu0 0.0
    %1445 = vmatprep.subr.mxu0 0.0
    %1446 = vmatpush1.msra.mxu0 0.0
    %1447 = vmatprep.subr.mxu0 0.0
    %1448 = vmatpush1.msra.mxu0 0.0
    %1449 = vmatprep.mubr.f32.mxu0 0.0
    %1450 = vmatmul.mubr.f32.gmra.mrb[0].mxu0 %v1383
    %v1451 = vpop.f32.mrb[0].mxu0
    %v1452 = vadd.f32 %v209, %v1451
    %v1453 = vpop.f32.mrb[0].mxu0
    %1454 = vdwg.mxu0
    %v1455 = vtanh.pop %v1452
    %v1456 = vsel %vm191, %v1455, %v1300
    %v1457 = vld [vmem:[%s7] sm:$0xff]
    %v1458 = vld [vmem:[%s7 + $0x8] sm:$0xff]
    %v1459 = vld [vmem:[%s7 + $0x10] sm:$0xff]
    %v1460 = vld [vmem:[%s7 + $0x18] sm:$0xff]
    %v1461 = vld [vmem:[%s8] sm:$0x1]
    %v1463 = vlaneseq
    %v1464 = vshrl.u32 %v1463, 7
    %v1465 = vsub.s32 0, %v1464
    %v1466 = vrot.slane %v1461, %v1465
    %v1469 = vsel %vm211, %v1456, 0
    %1471 = vmatprep.subr.mxu0 0.0
    %1472 = vmatpush1.msra.mxu0 %v1457
    %1473 = vmatprep.subr.mxu0 0.0
    %1474 = vmatpush1.msra.mxu0 %v1458
    %1475 = vmatprep.subr.mxu0 0.0
    %1476 = vmatpush1.msra.mxu0 %v1459
    %1477 = vmatprep.subr.mxu0 0.0
    %1478 = vmatpush1.msra.mxu0 %v1460
    %1479 = vmatprep.subr.mxu0 0.0
    %1480 = vmatpush1.msra.mxu0 0.0
    %1481 = vmatprep.subr.mxu0 0.0
    %1482 = vmatpush1.msra.mxu0 0.0
    %1483 = vmatprep.subr.mxu0 0.0
    %1484 = vmatpush1.msra.mxu0 0.0
    %1485 = vmatprep.subr.mxu0 0.0
    %1486 = vmatpush1.msra.mxu0 0.0
    %1487 = vmatprep.subr.mxu0 0.0
    %1488 = vmatpush1.msra.mxu0 0.0
    %1489 = vmatprep.subr.mxu0 0.0
    %1490 = vmatpush1.msra.mxu0 0.0
    %1491 = vmatprep.subr.mxu0 0.0
    %1492 = vmatpush1.msra.mxu0 0.0
    %1493 = vmatprep.subr.mxu0 0.0
    %1494 = vmatpush1.msra.mxu0 0.0
    %1495 = vmatprep.subr.mxu0 0.0
    %1496 = vmatpush1.msra.mxu0 0.0
    %1497 = vmatprep.subr.mxu0 0.0
    %1498 = vmatpush1.msra.mxu0 0.0
    %1499 = vmatprep.subr.mxu0 0.0
    %1500 = vmatpush1.msra.mxu0 0.0
    %1501 = vmatprep.subr.mxu0 0.0
    %1502 = vmatpush1.msra.mxu0 0.0
    %1503 = vmatprep.subr.mxu0 0.0
    %1504 = vmatpush1.msra.mxu0 0.0
    %1505 = vmatprep.subr.mxu0 0.0
    %1506 = vmatpush1.msra.mxu0 0.0
    %1507 = vmatprep.subr.mxu0 0.0
    %1508 = vmatpush1.msra.mxu0 0.0
    %1509 = vmatprep.subr.mxu0 0.0
    %1510 = vmatpush1.msra.mxu0 0.0
    %1511 = vmatprep.subr.mxu0 0.0
    %1512 = vmatpush1.msra.mxu0 0.0
    %1513 = vmatprep.subr.mxu0 0.0
    %1514 = vmatpush1.msra.mxu0 0.0
    %1515 = vmatprep.subr.mxu0 0.0
    %1516 = vmatpush1.msra.mxu0 0.0
    %1517 = vmatprep.subr.mxu0 0.0
    %1518 = vmatpush1.msra.mxu0 0.0
    %1519 = vmatprep.subr.mxu0 0.0
    %1520 = vmatpush1.msra.mxu0 0.0
    %1521 = vmatprep.subr.mxu0 0.0
    %1522 = vmatpush1.msra.mxu0 0.0
    %1523 = vmatprep.subr.mxu0 0.0
    %1524 = vmatpush1.msra.mxu0 0.0
    %1525 = vmatprep.subr.mxu0 0.0
    %1526 = vmatpush1.msra.mxu0 0.0
    %1527 = vmatprep.subr.mxu0 0.0
    %1528 = vmatpush1.msra.mxu0 0.0
    %1529 = vmatprep.subr.mxu0 0.0
    %1530 = vmatpush1.msra.mxu0 0.0
    %1531 = vmatprep.subr.mxu0 0.0
    %1532 = vmatpush1.msra.mxu0 0.0
    %1533 = vmatprep.subr.mxu0 0.0
    %1534 = vmatpush1.msra.mxu0 0.0
    %1535 = vmatprep.mubr.f32.mxu0 0.0
    %1536 = vmatmul.mubr.f32.gmra.mrb[0].mxu0 %v1469
    %v1537 = vpop.f32.mrb[0].mxu0
    %v1538 = vadd.f32 %v1466, %v1537
    %v1539 = vpop.f32.mrb[0].mxu0
    %1540 = vdwg.mxu0
    %vm1541 = vcmask 64512
    %1542 = vst.msk [vmem:[#allocation2] sm:$0xff] %vm1541, %v1538
    // Predicated region
    $region38: #{tpu_custom_call.1} parent=1 // pred_check
      _
    $region39: #{tpu_custom_call.1} parent=1 // pred_check_branch
      %1544 = sbr.rel (0) target = $region41
    $region40: #{tpu_custom_call.1} parent=1 // pred_region
      %s1546 = ssub.s32 128, 128
      %1547 = vsyncadd [#allocation3], %s1546
      %s1549 = sshll.u32 [#allocation2], 4
      %s1550 = int_to_ptr.vmem [resolvable:$true] %s1549
      %1552 = dma.vmem_to_hbm [thread:$0]  %s1550, 128, %s9, [#allocation3]
    $region41: #{tpu_custom_call.1} parent=1 // pred_fallthru
      _
    // Predicated region
    $region42: #{tpu_custom_call.1} parent=1 // pred_check
      _
    $region43: #{tpu_custom_call.1} parent=1 // pred_check_branch
      %1554 = sbr.rel (0) target = $region45
    $region44: #{tpu_custom_call.1} parent=1 // pred_region
      %1555 = dma.done [#allocation3], 128
    $region45: #{tpu_custom_call.1} parent=1 // pred_fallthru
      _
    %1556 = vsyncpa [#allocation3], 1

</llo_original>
